<compile_context>
chip_gen: v7x
topology: tpu7x:2x2x1
jax: 0.10.0
libtpu: 0.0.40
codegen_flags: <defaults>
</compile_context>

<pallas_src>
from functools import partial

import jax
import jax.numpy as jnp
from jax.experimental import pallas as pl
from jax.experimental.pallas import tpu as pltpu

EPS = 1e-5  # nn.BatchNorm2d default eps


# ---------------------------------------------------------------------------
# Banded-weight construction (wrapper-side, XLA): fold the kw taps and the
# W-edge zero padding of a KxK 'same' conv into K block-banded
# (W*Cin, W*Cout) matrices (one per kh):
#   band_kh[win*Cin + ci, wout*Cout + co] = w[kh, win - wout + p, ci, co]
# and zero when the tap index falls outside [0, K) (this is exactly the zero
# padding at the left/right image edges).
# ---------------------------------------------------------------------------
def _banded_weight(w_hwio, W):
    K = w_hwio.shape[0]
    p = (K - 1) // 2
    win = jnp.arange(W)[:, None]
    wout = jnp.arange(W)[None, :]
    kw = win - wout + p                                   # (W, W)
    valid = (kw >= 0) & (kw < K)
    kw_c = jnp.clip(kw, 0, K - 1)
    bands = []
    for kh in range(K):
        sel = w_hwio[kh][kw_c]                            # (W, W, Cin, Cout)
        sel = jnp.where(valid[:, :, None, None], sel, jnp.zeros_like(sel))
        bands.append(jnp.transpose(sel, (0, 2, 1, 3)).reshape(
            W * w_hwio.shape[2], W * w_hwio.shape[3]))
    return jnp.stack(bands)                               # (K, W*Cin, W*Cout)


# ---------------------------------------------------------------------------
# Fused ResBlock kernel (single invocation, everything resident in VMEM).
# Layouts:
#   xpad_ref : (N, H+2p, W*Cin)   bf16   (zero rows top/bottom for conv1)
#   w1_ref   : (K, W*Cin,  W*Cout) bf16  banded conv1 weights (one per kh)
#   w2_ref   : (K, W*Cout, W*Cout) bf16  banded conv2 weights
#   ws_ref   : (W*Cin, W*Cout)     bf16  block-diagonal 1x1 skip weights
#   b1/b2/bs/gamma/beta refs : (1, W*Cout) f32, channel values tiled over W
#   g_ref    : (W*Cout, W*Cout)    f32   0/1 channel-grouping matrix
#   o_ref    : (N*H, W*Cout)       f32   lane-dense output
#   ypad_ref : (N, H+2p, W*Cout)   bf16  VMEM scratch (post-BN1/ReLU, H halo)
# ---------------------------------------------------------------------------
def _resblock_kernel(xpad_ref, w1_ref, w2_ref, ws_ref, b1_ref, b2_ref, bs_ref,
                     gamma_ref, beta_ref, g_ref, o_ref, ypad_ref,
                     *, N, H, W, Cin, Cout, K):
    p = (K - 1) // 2
    WCin, WCout = W * Cin, W * Cout
    NH = N * H
    count = jnp.float32(N * H * W)
    G = g_ref[...]                                        # (WCout, WCout) f32

    def bn_scale_shift(v):
        # Exact training-mode batch statistics over (N, H, W) per channel.
        s = jnp.sum(v, axis=0, keepdims=True)             # (1, WCout)
        sq = jnp.sum(v * v, axis=0, keepdims=True)
        # Grouping matmul = per-channel sum over W, broadcast back to lanes.
        mean = jnp.dot(s, G, preferred_element_type=jnp.float32) / count
        ex2 = jnp.dot(sq, G, preferred_element_type=jnp.float32) / count
        # TODO(synk): E[x^2]-E[x]^2 can cancel for huge activations; fine at O(1).
        var = jnp.maximum(ex2 - mean * mean, 0.0)
        inv = jax.lax.rsqrt(var + EPS)
        scale = gamma_ref[...] * inv
        shift = beta_ref[...] - mean * scale
        return scale, shift

    # ---- conv1: K banded matmuls, (NH, W*Cin) x (W*Cin, W*Cout) ----
    acc = jnp.zeros((NH, WCout), jnp.float32)
    for kh in range(K):
        xk = xpad_ref[:, kh:kh + H, :].reshape(NH, WCin)  # bf16, lane-dense
        acc += jnp.dot(xk, w1_ref[kh], preferred_element_type=jnp.float32)
    y = acc + b1_ref[...]

    # ---- BN1 (exact batch stats) + ReLU; stage into zero-halo scratch ----
    scale1, shift1 = bn_scale_shift(y)
    yact = jnp.maximum(y * scale1 + shift1, 0.0).astype(jnp.bfloat16)
    ypad_ref[:, 0:p, :] = jnp.zeros((N, p, WCout), jnp.bfloat16)
    ypad_ref[:, p + H:, :] = jnp.zeros((N, p, WCout), jnp.bfloat16)
    ypad_ref[:, p:p + H, :] = yact.reshape(N, H, WCout)

    # ---- conv2: K banded matmuls, (NH, W*Cout) x (W*Cout, W*Cout) ----
    acc = jnp.zeros((NH, WCout), jnp.float32)
    for kh in range(K):
        yk = ypad_ref[:, kh:kh + H, :].reshape(NH, WCout)
        acc += jnp.dot(yk, w2_ref[kh], preferred_element_type=jnp.float32)
    z = acc + b2_ref[...]

    # ---- BN2 ----
    scale2, shift2 = bn_scale_shift(z)
    z = z * scale2 + shift2

    # ---- 1x1 skip conv + residual add + final ReLU (lane-dense store) ----
    x_in = xpad_ref[:, p:p + H, :].reshape(NH, WCin)      # unpadded x, bf16
    skip = jnp.dot(x_in, ws_ref[...],
                   preferred_element_type=jnp.float32) + bs_ref[...]
    o_ref[...] = jnp.maximum(z + skip, 0.0)


# ---------------------------------------------------------------------------
# Wrapper: layout prep (NCHW -> (N, H+2, W*Cin), banded weights, tiled
# per-channel vectors), one pallas_call, layout restore to NCHW.
# ---------------------------------------------------------------------------
def resblock_forward(x_nchw, params, k=3):
    N, Cin, H, W = x_nchw.shape
    Cout = params["w1"].shape[-1]
    p = (k - 1) // 2
    Hp = H + 2 * p
    WCin, WCout = W * Cin, W * Cout
    NH = N * H

    # NCHW -> NHWC -> W folded into lanes; bf16 activation stream; pad H only
    # (W-edge zero padding is encoded in the banded weights).
    x = jnp.transpose(x_nchw, (0, 2, 3, 1)).astype(jnp.bfloat16)
    xpad = jnp.pad(x.reshape(N, H, WCin), ((0, 0), (p, p), (0, 0)))

    # NOTE: these weight rearrangements are tiny and could be precomputed once
    # per model; done per call here for a self-contained example.
    w1b = _banded_weight(params["w1"].astype(jnp.bfloat16), W)   # (k, WCin, WCout)
    w2b = _banded_weight(params["w2"].astype(jnp.bfloat16), W)   # (k, WCout, WCout)
    eye = jnp.eye(W, dtype=jnp.bfloat16)
    wsb = (eye[:, None, :, None] *
           params["ws"].astype(jnp.bfloat16)[None, :, None, :]).reshape(WCin, WCout)

    # Per-channel vectors tiled across the W-folded lane axis (w-major, c-minor).
    b1t = jnp.tile(params["b1"].astype(jnp.float32), (1, W))
    b2t = jnp.tile(params["b2"].astype(jnp.float32), (1, W))
    bst = jnp.tile(params["bs"].astype(jnp.float32), (1, W))
    gt = jnp.tile(params["gamma"].astype(jnp.float32), (1, W))
    bt = jnp.tile(params["beta"].astype(jnp.float32), (1, W))

    # 0/1 channel-grouping matrix: G[l, l'] = 1 iff lanes l, l' hold the same
    # channel (sum-over-W + broadcast-back in a single matmul).
    lanes = jnp.arange(WCout)
    G = (lanes[:, None] % Cout == lanes[None, :] % Cout).astype(jnp.float32)

    flops = int(2 * NH * WCin * WCout * k        # conv1 (banded)
                + 2 * NH * WCout * WCout * k     # conv2 (banded)
                + 2 * NH * WCin * WCout          # skip
                + 4 * 2 * WCout * WCout          # BN grouping matmuls
                + 12 * NH * WCout)               # elementwise
    bytes_accessed = int(xpad.size * 2 + w1b.size * 2 + w2b.size * 2
                         + wsb.size * 2 + 5 * WCout * 4 + G.size * 4
                         + NH * WCout * 4)

    out_flat = pl.pallas_call(
        partial(_resblock_kernel, N=N, H=H, W=W, Cin=Cin, Cout=Cout, K=k),
        grid=(1,),
        in_specs=[
            pl.BlockSpec((N, Hp, WCin), lambda i: (0, 0, 0)),      # xpad
            pl.BlockSpec((k, WCin, WCout), lambda i: (0, 0, 0)),   # w1 bands
            pl.BlockSpec((k, WCout, WCout), lambda i: (0, 0, 0)),  # w2 bands
            pl.BlockSpec((WCin, WCout), lambda i: (0, 0)),         # skip weight
            pl.BlockSpec((1, WCout), lambda i: (0, 0)),            # b1 tiled
            pl.BlockSpec((1, WCout), lambda i: (0, 0)),            # b2 tiled
            pl.BlockSpec((1, WCout), lambda i: (0, 0)),            # bs tiled
            pl.BlockSpec((1, WCout), lambda i: (0, 0)),            # gamma tiled
            pl.BlockSpec((1, WCout), lambda i: (0, 0)),            # beta tiled
            pl.BlockSpec((WCout, WCout), lambda i: (0, 0)),        # grouping G
        ],
        out_specs=pl.BlockSpec((NH, WCout), lambda i: (0, 0)),
        out_shape=jax.ShapeDtypeStruct((NH, WCout), jnp.float32),
        scratch_shapes=[pltpu.VMEM((N, Hp, WCout), jnp.bfloat16)],
        compiler_params=pltpu.CompilerParams(
            dimension_semantics=("arbitrary",),
            vmem_limit_bytes=32 * 1024 * 1024,
        ),
        cost_estimate=pl.CostEstimate(
            flops=flops, transcendentals=2 * WCout,
            bytes_accessed=bytes_accessed),
    )(xpad, w1b, w2b, wsb, b1t, b2t, bst, gt, bt, G)

    out = out_flat.reshape(N, H, W, Cout)
    return jnp.transpose(out, (0, 3, 1, 2))                # back to NCHW


# ---------------------------------------------------------------------------
# Deterministic parameter init (shapes per nn.Conv2d / nn.BatchNorm2d defaults)
# ---------------------------------------------------------------------------
def init_params(key, cin, cout, k=3):
    k1, k2, k3 = jax.random.split(key, 3)

    def conv_init(kk, shape, fan_in):
        bound = 1.0 / (fan_in ** 0.5)
        w = jax.random.uniform(kk, shape, jnp.float32, -bound, bound)
        b = jax.random.uniform(jax.random.fold_in(kk, 1), (1, shape[-1]),
                               jnp.float32, -bound, bound)
        return w, b

    w1, b1 = conv_init(k1, (k, k, cin, cout), cin * k * k)    # conv1 (HWIO)
    w2, b2 = conv_init(k2, (k, k, cout, cout), cout * k * k)  # conv2 (HWIO)
    ws, bs = conv_init(k3, (cin, cout), cin)                  # 1x1 skip conv
    gamma = jnp.ones((1, cout), jnp.float32)                  # BN default weight
    beta = jnp.zeros((1, cout), jnp.float32)                  # BN default bias
    return dict(w1=w1, b1=b1, w2=w2, b2=b2, ws=ws, bs=bs, gamma=gamma, beta=beta)


# ---------------------------------------------------------------------------
# Pure-JAX reference mirroring the kernel's mixed precision (bf16 inputs to
# the convs/MXU, f32 accumulation + BN math), for the correctness check.
# ---------------------------------------------------------------------------
def resblock_reference(x_nchw, params, k=3):
    N, Cin, H, W = x_nchw.shape
    Cout = params["w1"].shape[-1]
    x = jnp.transpose(x_nchw, (0, 2, 3, 1)).astype(jnp.bfloat16)
    w1 = params["w1"].astype(jnp.bfloat16)
    w2 = params["w2"].astype(jnp.bfloat16)
    ws = params["ws"].astype(jnp.bfloat16)

    def conv(xx, w, b):
        y = jax.lax.conv_general_dilated(
            xx, w, (1, 1), "SAME",
            dimension_numbers=("NHWC", "HWIO", "NHWC"),
            preferred_element_type=jnp.float32)
        return y + b.reshape(1, 1, 1, -1)

    def bn(y):
        mean = jnp.mean(y, axis=(0, 1, 2))
        var = jnp.mean(y * y, axis=(0, 1, 2)) - mean * mean
        inv = jax.lax.rsqrt(var + EPS)
        scale = params["gamma"].reshape(-1) * inv
        shift = params["beta"].reshape(-1) - mean * scale
        return y * scale + shift

    y_raw = conv(x, w1, params["b1"])
    y = jnp.maximum(bn(y_raw), 0.0).astype(jnp.bfloat16)
    z = bn(conv(y, w2, params["b2"]))
    skip = (jnp.dot(x.reshape(-1, Cin), ws,
                    preferred_element_type=jnp.float32).reshape(N, H, W, Cout)
            + params["bs"].reshape(1, 1, 1, -1))
    out = jnp.maximum(z + skip, 0.0)
    return jnp.transpose(out, (0, 3, 1, 2))


if __name__ == "__main__":
    key = jax.random.PRNGKey(0)
    kx, kp = jax.random.split(key)

    N, Cin, Cout, H, W = 2, 4, 8, 16, 16   # channels_in=4, channels_out=8, stride=1
    x = jax.random.normal(kx, (N, Cin, H, W), jnp.float32)   # PyTorch NCHW input
    params = init_params(kp, Cin, Cout)

    out = jax.jit(partial(resblock_forward, k=3))(x, params)
    out = jax.block_until_ready(out)
    assert out.shape == (N, Cout, H, W)

    ref = resblock_reference(x, params)
    max_err = float(jnp.max(jnp.abs(out - ref)))
    # outputs are O(1); tolerance covers bf16 rounding-order differences
    assert max_err < 1e-2, f"mismatch vs reference: {max_err}"

    # TODO(synk): BatchNorm running-stats update (training-time side effect) is
    # not reproduced; it does not affect the forward output.
    print("KERNEL_OK")
</pallas_src>

<mosaic_0001>
module attributes {stable_mosaic.version = 11 : i64} {
  func.func @_resblock_kernel(%arg0: i32, %arg1: memref<2x18x64xbf16, #tpu.memory_space<vmem>>, %arg2: memref<3x64x128xbf16, #tpu.memory_space<vmem>>, %arg3: memref<3x128x128xbf16, #tpu.memory_space<vmem>>, %arg4: memref<64x128xbf16, #tpu.memory_space<vmem>>, %arg5: memref<1x128xf32, #tpu.memory_space<vmem>>, %arg6: memref<1x128xf32, #tpu.memory_space<vmem>>, %arg7: memref<1x128xf32, #tpu.memory_space<vmem>>, %arg8: memref<1x128xf32, #tpu.memory_space<vmem>>, %arg9: memref<1x128xf32, #tpu.memory_space<vmem>>, %arg10: memref<128x128xf32, #tpu.memory_space<vmem>>, %arg11: memref<32x128xf32, #tpu.memory_space<vmem>>, %arg12: memref<2x18x128xbf16, #tpu.memory_space<vmem>>) attributes {dimension_semantics = [#tpu.dimension_semantics<arbitrary>], iteration_bounds = array<i64: 1>, scalar_prefetch = 0 : i64, scratch_operands = 1 : i64, tpu.core_type = #tpu.core_type<tc>, window_params = [{pipeline_mode = #tpu.pipeline_mode<synchronous>, transform_indices = @transform_0, window_bounds = array<i64: 2, 18, 64>}, {pipeline_mode = #tpu.pipeline_mode<synchronous>, transform_indices = @transform_1, window_bounds = array<i64: 3, 64, 128>}, {pipeline_mode = #tpu.pipeline_mode<synchronous>, transform_indices = @transform_2, window_bounds = array<i64: 3, 128, 128>}, {pipeline_mode = #tpu.pipeline_mode<synchronous>, transform_indices = @transform_3, window_bounds = array<i64: 64, 128>}, {pipeline_mode = #tpu.pipeline_mode<synchronous>, transform_indices = @transform_4, window_bounds = array<i64: 1, 128>}, {pipeline_mode = #tpu.pipeline_mode<synchronous>, transform_indices = @transform_5, window_bounds = array<i64: 1, 128>}, {pipeline_mode = #tpu.pipeline_mode<synchronous>, transform_indices = @transform_6, window_bounds = array<i64: 1, 128>}, {pipeline_mode = #tpu.pipeline_mode<synchronous>, transform_indices = @transform_7, window_bounds = array<i64: 1, 128>}, {pipeline_mode = #tpu.pipeline_mode<synchronous>, transform_indices = @transform_8, window_bounds = array<i64: 1, 128>}, {pipeline_mode = #tpu.pipeline_mode<synchronous>, transform_indices = @transform_9, window_bounds = array<i64: 128, 128>}, {pipeline_mode = #tpu.pipeline_mode<synchronous>, transform_indices = @transform_10, window_bounds = array<i64: 32, 128>}]} {
    %c0 = arith.constant 0 : index
    %c0_0 = arith.constant 0 : index
    %0 = vector.load %arg10[%c0, %c0_0] : memref<128x128xf32, #tpu.memory_space<vmem>>, vector<128x128xf32>
    %cst = arith.constant 0.000000e+00 : f32
    %1 = vector.broadcast %cst : f32 to vector<32x128xf32>
    %c0_1 = arith.constant 0 : index
    %c0_2 = arith.constant 0 : index
    %c0_3 = arith.constant 0 : index
    %2 = vector.load %arg1[%c0_1, %c0_2, %c0_3] : memref<2x18x64xbf16, #tpu.memory_space<vmem>>, vector<2x16x64xbf16>
    %3 = vector.shape_cast %2 : vector<2x16x64xbf16> to vector<32x64xbf16>
    %c0_4 = arith.constant 0 : index
    %c0_5 = arith.constant 0 : index
    %c0_6 = arith.constant 0 : index
    %4 = vector.load %arg2[%c0_4, %c0_5, %c0_6] : memref<3x64x128xbf16, #tpu.memory_space<vmem>>, vector<1x64x128xbf16>
    %5 = vector.shape_cast %4 : vector<1x64x128xbf16> to vector<64x128xbf16>
    %cst_7 = arith.constant dense<0.000000e+00> : vector<32x128xf32>
    %6 = tpu.matmul %3, %5, %cst_7 {dimension_numbers = #tpu.dot_dimension_numbers<[1], [0], [0], [1], [0, 0, 1, 1], [], []>} : vector<32x64xbf16>, vector<64x128xbf16>, vector<32x128xf32> -> vector<32x128xf32>
    %7 = arith.addf %1, %6 : vector<32x128xf32>
    %c0_8 = arith.constant 0 : index
    %c1 = arith.constant 1 : index
    %c0_9 = arith.constant 0 : index
    %8 = vector.load %arg1[%c0_8, %c1, %c0_9] : memref<2x18x64xbf16, #tpu.memory_space<vmem>>, vector<2x16x64xbf16>
    %9 = vector.shape_cast %8 : vector<2x16x64xbf16> to vector<32x64xbf16>
    %c1_10 = arith.constant 1 : index
    %c0_11 = arith.constant 0 : index
    %c0_12 = arith.constant 0 : index
    %10 = vector.load %arg2[%c1_10, %c0_11, %c0_12] : memref<3x64x128xbf16, #tpu.memory_space<vmem>>, vector<1x64x128xbf16>
    %11 = vector.shape_cast %10 : vector<1x64x128xbf16> to vector<64x128xbf16>
    %cst_13 = arith.constant dense<0.000000e+00> : vector<32x128xf32>
    %12 = tpu.matmul %9, %11, %cst_13 {dimension_numbers = #tpu.dot_dimension_numbers<[1], [0], [0], [1], [0, 0, 1, 1], [], []>} : vector<32x64xbf16>, vector<64x128xbf16>, vector<32x128xf32> -> vector<32x128xf32>
    %13 = arith.addf %7, %12 : vector<32x128xf32>
    %c0_14 = arith.constant 0 : index
    %c2 = arith.constant 2 : index
    %c0_15 = arith.constant 0 : index
    %14 = vector.load %arg1[%c0_14, %c2, %c0_15] : memref<2x18x64xbf16, #tpu.memory_space<vmem>>, vector<2x16x64xbf16>
    %15 = vector.shape_cast %14 : vector<2x16x64xbf16> to vector<32x64xbf16>
    %c2_16 = arith.constant 2 : index
    %c0_17 = arith.constant 0 : index
    %c0_18 = arith.constant 0 : index
    %16 = vector.load %arg2[%c2_16, %c0_17, %c0_18] : memref<3x64x128xbf16, #tpu.memory_space<vmem>>, vector<1x64x128xbf16>
    %17 = vector.shape_cast %16 : vector<1x64x128xbf16> to vector<64x128xbf16>
    %cst_19 = arith.constant dense<0.000000e+00> : vector<32x128xf32>
    %18 = tpu.matmul %15, %17, %cst_19 {dimension_numbers = #tpu.dot_dimension_numbers<[1], [0], [0], [1], [0, 0, 1, 1], [], []>} : vector<32x64xbf16>, vector<64x128xbf16>, vector<32x128xf32> -> vector<32x128xf32>
    %19 = arith.addf %13, %18 : vector<32x128xf32>
    %c0_20 = arith.constant 0 : index
    %c0_21 = arith.constant 0 : index
    %20 = vector.load %arg5[%c0_20, %c0_21] : memref<1x128xf32, #tpu.memory_space<vmem>>, vector<1x128xf32>
    %21 = vector.broadcast %20 : vector<1x128xf32> to vector<32x128xf32>
    %22 = arith.addf %19, %21 : vector<32x128xf32>
    %cst_22 = arith.constant dense<0.000000e+00> : vector<128xf32>
    %23 = vector.multi_reduction <add>, %22, %cst_22 [0] : vector<32x128xf32> to vector<128xf32>
    %24 = vector.shape_cast %23 : vector<128xf32> to vector<1x128xf32>
    %25 = arith.mulf %22, %22 : vector<32x128xf32>
    %cst_23 = arith.constant dense<0.000000e+00> : vector<128xf32>
    %26 = vector.multi_reduction <add>, %25, %cst_23 [0] : vector<32x128xf32> to vector<128xf32>
    %27 = vector.shape_cast %26 : vector<128xf32> to vector<1x128xf32>
    %cst_24 = arith.constant dense<0.000000e+00> : vector<1x128xf32>
    %28 = tpu.matmul %24, %0, %cst_24 {dimension_numbers = #tpu.dot_dimension_numbers<[1], [0], [0], [1], [0, 0, 1, 1], [], []>} : vector<1x128xf32>, vector<128x128xf32>, vector<1x128xf32> -> vector<1x128xf32>
    %cst_25 = arith.constant 5.120000e+02 : f32
    %29 = vector.broadcast %cst_25 : f32 to vector<1x128xf32>
    %30 = arith.divf %28, %29 : vector<1x128xf32>
    %cst_26 = arith.constant dense<0.000000e+00> : vector<1x128xf32>
    %31 = tpu.matmul %27, %0, %cst_26 {dimension_numbers = #tpu.dot_dimension_numbers<[1], [0], [0], [1], [0, 0, 1, 1], [], []>} : vector<1x128xf32>, vector<128x128xf32>, vector<1x128xf32> -> vector<1x128xf32>
    %cst_27 = arith.constant 5.120000e+02 : f32
    %32 = vector.broadcast %cst_27 : f32 to vector<1x128xf32>
    %33 = arith.divf %31, %32 : vector<1x128xf32>
    %34 = arith.mulf %30, %30 : vector<1x128xf32>
    %35 = arith.subf %33, %34 : vector<1x128xf32>
    %cst_28 = arith.constant 0.000000e+00 : f32
    %36 = vector.broadcast %cst_28 : f32 to vector<1x128xf32>
    %37 = arith.maximumf %35, %36 : vector<1x128xf32>
    %cst_29 = arith.constant 9.99999974E-6 : f32
    %38 = vector.broadcast %cst_29 : f32 to vector<1x128xf32>
    %39 = arith.addf %37, %38 : vector<1x128xf32>
    %40 = math.rsqrt %39 : vector<1x128xf32>
    %c0_30 = arith.constant 0 : index
    %c0_31 = arith.constant 0 : index
    %41 = vector.load %arg8[%c0_30, %c0_31] : memref<1x128xf32, #tpu.memory_space<vmem>>, vector<1x128xf32>
    %42 = arith.mulf %41, %40 : vector<1x128xf32>
    %c0_32 = arith.constant 0 : index
    %c0_33 = arith.constant 0 : index
    %43 = vector.load %arg9[%c0_32, %c0_33] : memref<1x128xf32, #tpu.memory_space<vmem>>, vector<1x128xf32>
    %44 = arith.mulf %30, %42 : vector<1x128xf32>
    %45 = arith.subf %43, %44 : vector<1x128xf32>
    %46 = vector.broadcast %42 : vector<1x128xf32> to vector<32x128xf32>
    %47 = arith.mulf %22, %46 : vector<32x128xf32>
    %48 = vector.broadcast %45 : vector<1x128xf32> to vector<32x128xf32>
    %49 = arith.addf %47, %48 : vector<32x128xf32>
    %cst_34 = arith.constant 0.000000e+00 : f32
    %50 = vector.broadcast %cst_34 : f32 to vector<32x128xf32>
    %51 = arith.maximumf %49, %50 : vector<32x128xf32>
    %52 = arith.truncf %51 : vector<32x128xf32> to vector<32x128xbf16>
    %cst_35 = arith.constant 0.000000e+00 : bf16
    %53 = vector.broadcast %cst_35 : bf16 to vector<2x1x128xbf16>
    %c0_36 = arith.constant 0 : index
    %c0_37 = arith.constant 0 : index
    %c0_38 = arith.constant 0 : index
    %54 = vector.load %arg12[%c0_36, %c0_37, %c0_38] : memref<2x18x128xbf16, #tpu.memory_space<vmem>>, vector<2x1x128xbf16>
    tpu.vector_store %arg12[%c0_36, %c0_37, %c0_38], %53 {strides = array<i32>} : memref<2x18x128xbf16, #tpu.memory_space<vmem>>, vector<2x1x128xbf16>,
    %cst_39 = arith.constant 0.000000e+00 : bf16
    %55 = vector.broadcast %cst_39 : bf16 to vector<2x1x128xbf16>
    %c0_40 = arith.constant 0 : index
    %c17 = arith.constant 17 : index
    %c0_41 = arith.constant 0 : index
    %56 = vector.load %arg12[%c0_40, %c17, %c0_41] : memref<2x18x128xbf16, #tpu.memory_space<vmem>>, vector<2x1x128xbf16>
    tpu.vector_store %arg12[%c0_40, %c17, %c0_41], %55 {strides = array<i32>} : memref<2x18x128xbf16, #tpu.memory_space<vmem>>, vector<2x1x128xbf16>,
    %57 = vector.shape_cast %52 : vector<32x128xbf16> to vector<2x16x128xbf16>
    %c0_42 = arith.constant 0 : index
    %c1_43 = arith.constant 1 : index
    %c0_44 = arith.constant 0 : index
    %58 = vector.load %arg12[%c0_42, %c1_43, %c0_44] : memref<2x18x128xbf16, #tpu.memory_space<vmem>>, vector<2x16x128xbf16>
    tpu.vector_store %arg12[%c0_42, %c1_43, %c0_44], %57 {strides = array<i32>} : memref<2x18x128xbf16, #tpu.memory_space<vmem>>, vector<2x16x128xbf16>,
    %cst_45 = arith.constant 0.000000e+00 : f32
    %59 = vector.broadcast %cst_45 : f32 to vector<32x128xf32>
    %c0_46 = arith.constant 0 : index
    %c0_47 = arith.constant 0 : index
    %c0_48 = arith.constant 0 : index
    %60 = vector.load %arg12[%c0_46, %c0_47, %c0_48] : memref<2x18x128xbf16, #tpu.memory_space<vmem>>, vector<2x16x128xbf16>
    %61 = vector.shape_cast %60 : vector<2x16x128xbf16> to vector<32x128xbf16>
    %c0_49 = arith.constant 0 : index
    %c0_50 = arith.constant 0 : index
    %c0_51 = arith.constant 0 : index
    %62 = vector.load %arg3[%c0_49, %c0_50, %c0_51] : memref<3x128x128xbf16, #tpu.memory_space<vmem>>, vector<1x128x128xbf16>
    %63 = vector.shape_cast %62 : vector<1x128x128xbf16> to vector<128x128xbf16>
    %cst_52 = arith.constant dense<0.000000e+00> : vector<32x128xf32>
    %64 = tpu.matmul %61, %63, %cst_52 {dimension_numbers = #tpu.dot_dimension_numbers<[1], [0], [0], [1], [0, 0, 1, 1], [], []>} : vector<32x128xbf16>, vector<128x128xbf16>, vector<32x128xf32> -> vector<32x128xf32>
    %65 = arith.addf %59, %64 : vector<32x128xf32>
    %c0_53 = arith.constant 0 : index
    %c1_54 = arith.constant 1 : index
    %c0_55 = arith.constant 0 : index
    %66 = vector.load %arg12[%c0_53, %c1_54, %c0_55] : memref<2x18x128xbf16, #tpu.memory_space<vmem>>, vector<2x16x128xbf16>
    %67 = vector.shape_cast %66 : vector<2x16x128xbf16> to vector<32x128xbf16>
    %c1_56 = arith.constant 1 : index
    %c0_57 = arith.constant 0 : index
    %c0_58 = arith.constant 0 : index
    %68 = vector.load %arg3[%c1_56, %c0_57, %c0_58] : memref<3x128x128xbf16, #tpu.memory_space<vmem>>, vector<1x128x128xbf16>
    %69 = vector.shape_cast %68 : vector<1x128x128xbf16> to vector<128x128xbf16>
    %cst_59 = arith.constant dense<0.000000e+00> : vector<32x128xf32>
    %70 = tpu.matmul %67, %69, %cst_59 {dimension_numbers = #tpu.dot_dimension_numbers<[1], [0], [0], [1], [0, 0, 1, 1], [], []>} : vector<32x128xbf16>, vector<128x128xbf16>, vector<32x128xf32> -> vector<32x128xf32>
    %71 = arith.addf %65, %70 : vector<32x128xf32>
    %c0_60 = arith.constant 0 : index
    %c2_61 = arith.constant 2 : index
    %c0_62 = arith.constant 0 : index
    %72 = vector.load %arg12[%c0_60, %c2_61, %c0_62] : memref<2x18x128xbf16, #tpu.memory_space<vmem>>, vector<2x16x128xbf16>
    %73 = vector.shape_cast %72 : vector<2x16x128xbf16> to vector<32x128xbf16>
    %c2_63 = arith.constant 2 : index
    %c0_64 = arith.constant 0 : index
    %c0_65 = arith.constant 0 : index
    %74 = vector.load %arg3[%c2_63, %c0_64, %c0_65] : memref<3x128x128xbf16, #tpu.memory_space<vmem>>, vector<1x128x128xbf16>
    %75 = vector.shape_cast %74 : vector<1x128x128xbf16> to vector<128x128xbf16>
    %cst_66 = arith.constant dense<0.000000e+00> : vector<32x128xf32>
    %76 = tpu.matmul %73, %75, %cst_66 {dimension_numbers = #tpu.dot_dimension_numbers<[1], [0], [0], [1], [0, 0, 1, 1], [], []>} : vector<32x128xbf16>, vector<128x128xbf16>, vector<32x128xf32> -> vector<32x128xf32>
    %77 = arith.addf %71, %76 : vector<32x128xf32>
    %c0_67 = arith.constant 0 : index
    %c0_68 = arith.constant 0 : index
    %78 = vector.load %arg6[%c0_67, %c0_68] : memref<1x128xf32, #tpu.memory_space<vmem>>, vector<1x128xf32>
    %79 = vector.broadcast %78 : vector<1x128xf32> to vector<32x128xf32>
    %80 = arith.addf %77, %79 : vector<32x128xf32>
    %cst_69 = arith.constant dense<0.000000e+00> : vector<128xf32>
    %81 = vector.multi_reduction <add>, %80, %cst_69 [0] : vector<32x128xf32> to vector<128xf32>
    %82 = vector.shape_cast %81 : vector<128xf32> to vector<1x128xf32>
    %83 = arith.mulf %80, %80 : vector<32x128xf32>
    %cst_70 = arith.constant dense<0.000000e+00> : vector<128xf32>
    %84 = vector.multi_reduction <add>, %83, %cst_70 [0] : vector<32x128xf32> to vector<128xf32>
    %85 = vector.shape_cast %84 : vector<128xf32> to vector<1x128xf32>
    %cst_71 = arith.constant dense<0.000000e+00> : vector<1x128xf32>
    %86 = tpu.matmul %82, %0, %cst_71 {dimension_numbers = #tpu.dot_dimension_numbers<[1], [0], [0], [1], [0, 0, 1, 1], [], []>} : vector<1x128xf32>, vector<128x128xf32>, vector<1x128xf32> -> vector<1x128xf32>
    %cst_72 = arith.constant 5.120000e+02 : f32
    %87 = vector.broadcast %cst_72 : f32 to vector<1x128xf32>
    %88 = arith.divf %86, %87 : vector<1x128xf32>
    %cst_73 = arith.constant dense<0.000000e+00> : vector<1x128xf32>
    %89 = tpu.matmul %85, %0, %cst_73 {dimension_numbers = #tpu.dot_dimension_numbers<[1], [0], [0], [1], [0, 0, 1, 1], [], []>} : vector<1x128xf32>, vector<128x128xf32>, vector<1x128xf32> -> vector<1x128xf32>
    %cst_74 = arith.constant 5.120000e+02 : f32
    %90 = vector.broadcast %cst_74 : f32 to vector<1x128xf32>
    %91 = arith.divf %89, %90 : vector<1x128xf32>
    %92 = arith.mulf %88, %88 : vector<1x128xf32>
    %93 = arith.subf %91, %92 : vector<1x128xf32>
    %cst_75 = arith.constant 0.000000e+00 : f32
    %94 = vector.broadcast %cst_75 : f32 to vector<1x128xf32>
    %95 = arith.maximumf %93, %94 : vector<1x128xf32>
    %cst_76 = arith.constant 9.99999974E-6 : f32
    %96 = vector.broadcast %cst_76 : f32 to vector<1x128xf32>
    %97 = arith.addf %95, %96 : vector<1x128xf32>
    %98 = math.rsqrt %97 : vector<1x128xf32>
    %c0_77 = arith.constant 0 : index
    %c0_78 = arith.constant 0 : index
    %99 = vector.load %arg8[%c0_77, %c0_78] : memref<1x128xf32, #tpu.memory_space<vmem>>, vector<1x128xf32>
    %100 = arith.mulf %99, %98 : vector<1x128xf32>
    %c0_79 = arith.constant 0 : index
    %c0_80 = arith.constant 0 : index
    %101 = vector.load %arg9[%c0_79, %c0_80] : memref<1x128xf32, #tpu.memory_space<vmem>>, vector<1x128xf32>
    %102 = arith.mulf %88, %100 : vector<1x128xf32>
    %103 = arith.subf %101, %102 : vector<1x128xf32>
    %104 = vector.broadcast %100 : vector<1x128xf32> to vector<32x128xf32>
    %105 = arith.mulf %80, %104 : vector<32x128xf32>
    %106 = vector.broadcast %103 : vector<1x128xf32> to vector<32x128xf32>
    %107 = arith.addf %105, %106 : vector<32x128xf32>
    %c0_81 = arith.constant 0 : index
    %c1_82 = arith.constant 1 : index
    %c0_83 = arith.constant 0 : index
    %108 = vector.load %arg1[%c0_81, %c1_82, %c0_83] : memref<2x18x64xbf16, #tpu.memory_space<vmem>>, vector<2x16x64xbf16>
    %109 = vector.shape_cast %108 : vector<2x16x64xbf16> to vector<32x64xbf16>
    %c0_84 = arith.constant 0 : index
    %c0_85 = arith.constant 0 : index
    %110 = vector.load %arg4[%c0_84, %c0_85] : memref<64x128xbf16, #tpu.memory_space<vmem>>, vector<64x128xbf16>
    %cst_86 = arith.constant dense<0.000000e+00> : vector<32x128xf32>
    %111 = tpu.matmul %109, %110, %cst_86 {dimension_numbers = #tpu.dot_dimension_numbers<[1], [0], [0], [1], [0, 0, 1, 1], [], []>} : vector<32x64xbf16>, vector<64x128xbf16>, vector<32x128xf32> -> vector<32x128xf32>
    %c0_87 = arith.constant 0 : index
    %c0_88 = arith.constant 0 : index
    %112 = vector.load %arg7[%c0_87, %c0_88] : memref<1x128xf32, #tpu.memory_space<vmem>>, vector<1x128xf32>
    %113 = vector.broadcast %112 : vector<1x128xf32> to vector<32x128xf32>
    %114 = arith.addf %111, %113 : vector<32x128xf32>
    %115 = arith.addf %107, %114 : vector<32x128xf32>
    %cst_89 = arith.constant 0.000000e+00 : f32
    %116 = vector.broadcast %cst_89 : f32 to vector<32x128xf32>
    %117 = arith.maximumf %115, %116 : vector<32x128xf32>
    %c0_90 = arith.constant 0 : index
    %c0_91 = arith.constant 0 : index
    %118 = vector.load %arg11[%c0_90, %c0_91] : memref<32x128xf32, #tpu.memory_space<vmem>>, vector<32x128xf32>
    tpu.vector_store %arg11[%c0_90, %c0_91], %117 {strides = array<i32>} : memref<32x128xf32, #tpu.memory_space<vmem>>, vector<32x128xf32>,
    return
  }
  func.func @transform_0(%arg0: i32) -> (i32, i32, i32) {
    %c0_i32 = arith.constant 0 : i32
    %c0_i32_0 = arith.constant 0 : i32
    %c0_i32_1 = arith.constant 0 : i32
    %c0_i32_2 = arith.constant 0 : i32
    return %c0_i32, %c0_i32_0, %c0_i32_1 : i32, i32, i32
  }
  func.func @transform_1(%arg0: i32) -> (i32, i32, i32) {
    %c0_i32 = arith.constant 0 : i32
    %c0_i32_0 = arith.constant 0 : i32
    %c0_i32_1 = arith.constant 0 : i32
    %c0_i32_2 = arith.constant 0 : i32
    return %c0_i32, %c0_i32_0, %c0_i32_1 : i32, i32, i32
  }
  func.func @transform_2(%arg0: i32) -> (i32, i32, i32) {
    %c0_i32 = arith.constant 0 : i32
    %c0_i32_0 = arith.constant 0 : i32
    %c0_i32_1 = arith.constant 0 : i32
    %c0_i32_2 = arith.constant 0 : i32
    return %c0_i32, %c0_i32_0, %c0_i32_1 : i32, i32, i32
  }
  func.func @transform_3(%arg0: i32) -> (i32, i32) {
    %c0_i32 = arith.constant 0 : i32
    %c0_i32_0 = arith.constant 0 : i32
    %c0_i32_1 = arith.constant 0 : i32
    return %c0_i32, %c0_i32_0 : i32, i32
  }
  func.func @transform_4(%arg0: i32) -> (i32, i32) {
    %c0_i32 = arith.constant 0 : i32
    %c0_i32_0 = arith.constant 0 : i32
    %c0_i32_1 = arith.constant 0 : i32
    return %c0_i32, %c0_i32_0 : i32, i32
  }
  func.func @transform_5(%arg0: i32) -> (i32, i32) {
    %c0_i32 = arith.constant 0 : i32
    %c0_i32_0 = arith.constant 0 : i32
    %c0_i32_1 = arith.constant 0 : i32
    return %c0_i32, %c0_i32_0 : i32, i32
  }
  func.func @transform_6(%arg0: i32) -> (i32, i32) {
    %c0_i32 = arith.constant 0 : i32
    %c0_i32_0 = arith.constant 0 : i32
    %c0_i32_1 = arith.constant 0 : i32
    return %c0_i32, %c0_i32_0 : i32, i32
  }
  func.func @transform_7(%arg0: i32) -> (i32, i32) {
    %c0_i32 = arith.constant 0 : i32
    %c0_i32_0 = arith.constant 0 : i32
    %c0_i32_1 = arith.constant 0 : i32
    return %c0_i32, %c0_i32_0 : i32, i32
  }
  func.func @transform_8(%arg0: i32) -> (i32, i32) {
    %c0_i32 = arith.constant 0 : i32
    %c0_i32_0 = arith.constant 0 : i32
    %c0_i32_1 = arith.constant 0 : i32
    return %c0_i32, %c0_i32_0 : i32, i32
  }
  func.func @transform_9(%arg0: i32) -> (i32, i32) {
    %c0_i32 = arith.constant 0 : i32
    %c0_i32_0 = arith.constant 0 : i32
    %c0_i32_1 = arith.constant 0 : i32
    return %c0_i32, %c0_i32_0 : i32, i32
  }
  func.func @transform_10(%arg0: i32) -> (i32, i32) {
    %c0_i32 = arith.constant 0 : i32
    %c0_i32_0 = arith.constant 0 : i32
    %c0_i32_1 = arith.constant 0 : i32
    return %c0_i32, %c0_i32_0 : i32, i32
  }
}

</mosaic_0001>

<llo_original>
// kernel: resblock_forward.1
$region0: #{resblock_forward.1}
  #allocation0 [shape = 'u32[]', space=smem, size = 0x4, offset = 0x4, fixed_abs, tag = 'smem constant byte address 0x4 - core index']
  #allocation1 [shape = 'u32[144,128]{1,0:T(1,128)}', space=vmem, size = 0x12000, scoped, tag = 'internal scratch']
  #allocation2 [shape = 'bf16[2,18,128]{2,1,0:T(8,128)(2,1)}', space=vmem, size = 0x3000, scoped, tag = 'scratch operand']
  %s0 = inlined_call_operand.vmem [shape: bf16[2,18,64], index: 0, kind: input, shape index: {}]
  %s1 = inlined_call_operand.vmem [shape: bf16[3,64,128], index: 1, kind: input, shape index: {}]
  %s2 = inlined_call_operand.vmem [shape: bf16[3,128,128], index: 2, kind: input, shape index: {}]
  %s3 = inlined_call_operand.vmem [shape: bf16[64,128], index: 3, kind: input, shape index: {}]
  %s4 = inlined_call_operand.vmem [shape: f32[1,128], index: 4, kind: input, shape index: {}]
  %s5 = inlined_call_operand.vmem [shape: f32[1,128], index: 5, kind: input, shape index: {}]
  %s6 = inlined_call_operand.vmem [shape: f32[1,128], index: 6, kind: input, shape index: {}]
  %s7 = inlined_call_operand.vmem [shape: f32[1,128], index: 7, kind: input, shape index: {}]
  %s8 = inlined_call_operand.vmem [shape: f32[1,128], index: 8, kind: input, shape index: {}]
  %s9 = inlined_call_operand.vmem [shape: f32[128,128], index: 9, kind: input, shape index: {}]
  %s10 = inlined_call_operand.vmem [shape: f32[32,128], index: 10, kind: output, shape index: {}]
  %s11 = sld [smem:[#allocation0]]
  $region50: #{resblock_forward.1} parent=0
    _
  %s13 = ssub.s32 1, %s11
  %s14 = scalar_select 0, %s13, %s11
  // Predicated region
  $region2: #{resblock_forward.1} parent=0 // pred_check
    _
  $region3: #{resblock_forward.1} parent=0 // pred_check_branch
    %16 = sbr.rel (0) target = $region5
  $region4: #{resblock_forward.1} parent=0 // pred_region
    _
  $region5: #{resblock_forward.1} parent=0 // pred_fallthru
    _
  // Predicated region
  $region6: #{resblock_forward.1} parent=0 // pred_check
    _
  $region7: #{resblock_forward.1} parent=0 // pred_check_branch
    %18 = sbr.rel (0) target = $region9
  $region8: #{resblock_forward.1} parent=0 // pred_region
    _
  $region9: #{resblock_forward.1} parent=0 // pred_fallthru
    _
  // Predicated region
  $region10: #{resblock_forward.1} parent=0 // pred_check
    _
  $region11: #{resblock_forward.1} parent=0 // pred_check_branch
    %20 = sbr.rel (0) target = $region13
  $region12: #{resblock_forward.1} parent=0 // pred_region
    _
  $region13: #{resblock_forward.1} parent=0 // pred_fallthru
    _
  // Predicated region
  $region14: #{resblock_forward.1} parent=0 // pred_check
    _
  $region15: #{resblock_forward.1} parent=0 // pred_check_branch
    %22 = sbr.rel (0) target = $region17
  $region16: #{resblock_forward.1} parent=0 // pred_region
    _
  $region17: #{resblock_forward.1} parent=0 // pred_fallthru
    _
  // Predicated region
  $region18: #{resblock_forward.1} parent=0 // pred_check
    _
  $region19: #{resblock_forward.1} parent=0 // pred_check_branch
    %24 = sbr.rel (0) target = $region21
  $region20: #{resblock_forward.1} parent=0 // pred_region
    _
  $region21: #{resblock_forward.1} parent=0 // pred_fallthru
    _
  // Predicated region
  $region22: #{resblock_forward.1} parent=0 // pred_check
    _
  $region23: #{resblock_forward.1} parent=0 // pred_check_branch
    %26 = sbr.rel (0) target = $region25
  $region24: #{resblock_forward.1} parent=0 // pred_region
    _
  $region25: #{resblock_forward.1} parent=0 // pred_fallthru
    _
  // Predicated region
  $region26: #{resblock_forward.1} parent=0 // pred_check
    _
  $region27: #{resblock_forward.1} parent=0 // pred_check_branch
    %28 = sbr.rel (0) target = $region29
  $region28: #{resblock_forward.1} parent=0 // pred_region
    _
  $region29: #{resblock_forward.1} parent=0 // pred_fallthru
    _
  // Predicated region
  $region30: #{resblock_forward.1} parent=0 // pred_check
    _
  $region31: #{resblock_forward.1} parent=0 // pred_check_branch
    %30 = sbr.rel (0) target = $region33
  $region32: #{resblock_forward.1} parent=0 // pred_region
    _
  $region33: #{resblock_forward.1} parent=0 // pred_fallthru
    _
  // Predicated region
  $region34: #{resblock_forward.1} parent=0 // pred_check
    _
  $region35: #{resblock_forward.1} parent=0 // pred_check_branch
    %32 = sbr.rel (0) target = $region37
  $region36: #{resblock_forward.1} parent=0 // pred_region
    _
  $region37: #{resblock_forward.1} parent=0 // pred_fallthru
    _
  // Predicated region
  $region38: #{resblock_forward.1} parent=0 // pred_check
    _
  $region39: #{resblock_forward.1} parent=0 // pred_check_branch
    %34 = sbr.rel (0) target = $region41
  $region40: #{resblock_forward.1} parent=0 // pred_region
    _
  $region41: #{resblock_forward.1} parent=0 // pred_fallthru
    _
  %v36 = vld [vmem:[%s9] sm:$0xff]
  %v37 = vld [vmem:[%s9 + $0x8] sm:$0xff]
  %v38 = vld [vmem:[%s9 + $0x10] sm:$0xff]
  %v39 = vld [vmem:[%s9 + $0x18] sm:$0xff]
  %v40 = vld [vmem:[%s9 + $0x20] sm:$0xff]
  %v41 = vld [vmem:[%s9 + $0x28] sm:$0xff]
  %v42 = vld [vmem:[%s9 + $0x30] sm:$0xff]
  %v43 = vld [vmem:[%s9 + $0x38] sm:$0xff]
  %v44 = vld [vmem:[%s9 + $0x40] sm:$0xff]
  %v45 = vld [vmem:[%s9 + $0x48] sm:$0xff]
  %v46 = vld [vmem:[%s9 + $0x50] sm:$0xff]
  %v47 = vld [vmem:[%s9 + $0x58] sm:$0xff]
  %v48 = vld [vmem:[%s9 + $0x60] sm:$0xff]
  %v49 = vld [vmem:[%s9 + $0x68] sm:$0xff]
  %v50 = vld [vmem:[%s9 + $0x70] sm:$0xff]
  %v51 = vld [vmem:[%s9 + $0x78] sm:$0xff]
  %v52 = vld [vmem:[%s0] sm:$0xf]
  %v53 = vld [vmem:[%s0 + $0x4] sm:$0xf]
  %v54 = vld [vmem:[%s0 + $0xc] sm:$0xf]
  %v55 = vld [vmem:[%s0 + $0x10] sm:$0xf]
  %v56 = vld [vmem:[%s1] sm:$0xf]
  %v57 = vld [vmem:[%s1 + $0x4] sm:$0xf]
  %v58 = vld [vmem:[%s1 + $0x8] sm:$0xf]
  %v59 = vld [vmem:[%s1 + $0xc] sm:$0xf]
  %v60 = vld [vmem:[%s1 + $0x10] sm:$0xf]
  %v61 = vld [vmem:[%s1 + $0x14] sm:$0xf]
  %v62 = vld [vmem:[%s1 + $0x18] sm:$0xf]
  %v63 = vld [vmem:[%s1 + $0x1c] sm:$0xf]
  %v64 = vld [vmem:[%s0 + $0x8] sm:$0x1]
  %v65 = vld [vmem:[%s0 + $0x14] sm:$0x1]
  %vm66 = vsmask.f32 3328
  %vm67 = vsmask.f32 7440
  %vm68 = vmor %vm66, %vm67
  %v70 = vshrl.u32 %v52, 16
  %v72 = vrot.slane %v70, 4
  %v73 = vshll.u32 %v52, 16
  %v75 = vrot.slane %v73, 5
  %v76 = vor.u32 %v72, %v75
  %v77 = vrot.slane %v76, 4
  %v79 = vshll.u32 %v53, 16
  %v81 = vrot.slane %v79, 5
  %v82 = vsel %vm68, %v77, %v81
  %v83 = vshrl.u32 %v53, 16
  %v85 = vrot.slane %v83, 4
  %v86 = vor.u32 %v85, %v81
  %v87 = vrot.slane %v86, 4
  %v89 = vshll.u32 %v64, 16
  %v91 = vrot.slane %v89, 5
  %v92 = vsel %vm68, %v87, %v91
  %v94 = vshrl.u32 %v54, 16
  %v96 = vrot.slane %v94, 4
  %v97 = vshll.u32 %v54, 16
  %v99 = vrot.slane %v97, 5
  %v100 = vor.u32 %v96, %v99
  %v101 = vrot.slane %v100, 4
  %v103 = vshll.u32 %v55, 16
  %v105 = vrot.slane %v103, 5
  %v106 = vsel %vm68, %v101, %v105
  %v107 = vshrl.u32 %v55, 16
  %v109 = vrot.slane %v107, 4
  %v110 = vor.u32 %v109, %v105
  %v111 = vrot.slane %v110, 4
  %v113 = vshll.u32 %v65, 16
  %v115 = vrot.slane %v113, 5
  %v116 = vsel %vm68, %v111, %v115
  %s117 = scalar_lea.vmem %s1, 32
  %v118 = vld [vmem:[%s117] sm:$0xf]
  %v119 = vld [vmem:[%s117 + $0x4] sm:$0xf]
  %v120 = vld [vmem:[%s117 + $0x8] sm:$0xf]
  %v121 = vld [vmem:[%s117 + $0xc] sm:$0xf]
  %v122 = vld [vmem:[%s117 + $0x10] sm:$0xf]
  %v123 = vld [vmem:[%s117 + $0x14] sm:$0xf]
  %v124 = vld [vmem:[%s117 + $0x18] sm:$0xf]
  %v125 = vld [vmem:[%s117 + $0x1c] sm:$0xf]
  %v126 = vunpack.c.l.b16 %v82
  %v127 = vunpack.c.l.b16 %v92
  %v128 = vunpack.c.l.b16 %v106
  %v129 = vunpack.c.l.b16 %v116
  %v130 = vpack.c.b16 %v127, %v126
  %v131 = vpack.c.b16 %v129, %v128
  %v140 = vunpack.c.l.b16 %v118
  %v141 = vunpack.c.l.b16 %v119
  %v142 = vunpack.c.l.b16 %v120
  %v143 = vunpack.c.l.b16 %v121
  %v144 = vunpack.c.l.b16 %v122
  %v145 = vunpack.c.l.b16 %v123
  %v146 = vunpack.c.l.b16 %v124
  %v147 = vunpack.c.l.b16 %v125
  %v148 = vpack.c.b16 %v141, %v140
  %v149 = vpack.c.b16 %v143, %v142
  %v150 = vpack.c.b16 %v145, %v144
  %v151 = vpack.c.b16 %v147, %v146
  %vm156 = vcmask 523264
  %v158 = vsel %vm156, %v130, 0
  %v161 = vsel %vm156, %v131, 0
  %163 = vmatprep.subr.bf16.mxu0 0
  %164 = vmatpush1.bf16.msra.mxu0 %v148
  %165 = vmatprep.subr.bf16.mxu0 0
  %166 = vmatpush1.bf16.msra.mxu0 %v149
  %167 = vmatprep.subr.bf16.mxu0 0
  %168 = vmatpush1.bf16.msra.mxu0 %v150
  %169 = vmatprep.subr.bf16.mxu0 0
  %170 = vmatpush1.bf16.msra.mxu0 %v151
  %171 = vmatprep.subr.bf16.mxu0 0
  %172 = vmatpush1.bf16.msra.mxu0 0
  %173 = vmatprep.subr.bf16.mxu0 0
  %174 = vmatpush1.bf16.msra.mxu0 0
  %175 = vmatprep.subr.bf16.mxu0 0
  %176 = vmatpush1.bf16.msra.mxu0 0
  %177 = vmatprep.subr.bf16.mxu0 0
  %178 = vmatpush1.bf16.msra.mxu0 0
  %179 = vmatprep.subr.bf16.mxu0 0
  %180 = vmatpush1.bf16.msra.mxu0 0
  %181 = vmatprep.subr.bf16.mxu0 0
  %182 = vmatpush1.bf16.msra.mxu0 0
  %183 = vmatprep.subr.bf16.mxu0 0
  %184 = vmatpush1.bf16.msra.mxu0 0
  %185 = vmatprep.subr.bf16.mxu0 0
  %186 = vmatpush1.bf16.msra.mxu0 0
  %187 = vmatprep.subr.bf16.mxu0 0
  %188 = vmatpush1.bf16.msra.mxu0 0
  %189 = vmatprep.subr.bf16.mxu0 0
  %190 = vmatpush1.bf16.msra.mxu0 0
  %191 = vmatprep.subr.bf16.mxu0 0
  %192 = vmatpush1.bf16.msra.mxu0 0
  %193 = vmatprep.subr.bf16.mxu0 0
  %194 = vmatpush1.bf16.msra.mxu0 0
  %195 = vmatprep.mubr.bf16.mxu0 0
  %196 = vmatmul.mubr.bf16.gmra.mrb[0].mxu0 %v158
  %v197 = vpop.f32.mrb[0].mxu0
  %v198 = vadd.f32 0.0, %v197
  %v199 = vpop.f32.mrb[0].mxu0
  %v200 = vpop.f32.mrb[0].mxu0
  %v201 = vadd.f32 0.0, %v200
  %v202 = vpop.f32.mrb[0].mxu0
  %203 = vmatprep.mubr.bf16.mxu0 0
  %204 = vmatmul.mubr.bf16.gmra.mrb[0].mxu0 %v161
  %v205 = vpop.f32.mrb[0].mxu0
  %v206 = vadd.f32 0.0, %v205
  %v207 = vpop.f32.mrb[0].mxu0
  %v208 = vpop.f32.mrb[0].mxu0
  %v209 = vadd.f32 0.0, %v208
  %v210 = vpop.f32.mrb[0].mxu0
  %211 = vdwg.mxu0
  %v216 = vunpack.c.l.b16 %v52
  %v217 = vunpack.c.l.b16 %v53
  %v218 = vunpack.c.l.b16 %v54
  %v219 = vunpack.c.l.b16 %v55
  %v220 = vpack.c.b16 %v217, %v216
  %v221 = vpack.c.b16 %v219, %v218
  %v230 = vunpack.c.l.b16 %v56
  %v231 = vunpack.c.l.b16 %v57
  %v232 = vunpack.c.l.b16 %v58
  %v233 = vunpack.c.l.b16 %v59
  %v234 = vunpack.c.l.b16 %v60
  %v235 = vunpack.c.l.b16 %v61
  %v236 = vunpack.c.l.b16 %v62
  %v237 = vunpack.c.l.b16 %v63
  %v238 = vpack.c.b16 %v231, %v230
  %v239 = vpack.c.b16 %v233, %v232
  %v240 = vpack.c.b16 %v235, %v234
  %v241 = vpack.c.b16 %v237, %v236
  %v247 = vsel %vm156, %v220, 0
  %v250 = vsel %vm156, %v221, 0
  %252 = vmatprep.subr.bf16.mxu0 0
  %253 = vmatpush1.bf16.msra.mxu0 %v238
  %254 = vmatprep.subr.bf16.mxu0 0
  %255 = vmatpush1.bf16.msra.mxu0 %v239
  %256 = vmatprep.subr.bf16.mxu0 0
  %257 = vmatpush1.bf16.msra.mxu0 %v240
  %258 = vmatprep.subr.bf16.mxu0 0
  %259 = vmatpush1.bf16.msra.mxu0 %v241
  %260 = vmatprep.subr.bf16.mxu0 0
  %261 = vmatpush1.bf16.msra.mxu0 0
  %262 = vmatprep.subr.bf16.mxu0 0
  %263 = vmatpush1.bf16.msra.mxu0 0
  %264 = vmatprep.subr.bf16.mxu0 0
  %265 = vmatpush1.bf16.msra.mxu0 0
  %266 = vmatprep.subr.bf16.mxu0 0
  %267 = vmatpush1.bf16.msra.mxu0 0
  %268 = vmatprep.subr.bf16.mxu0 0
  %269 = vmatpush1.bf16.msra.mxu0 0
  %270 = vmatprep.subr.bf16.mxu0 0
  %271 = vmatpush1.bf16.msra.mxu0 0
  %272 = vmatprep.subr.bf16.mxu0 0
  %273 = vmatpush1.bf16.msra.mxu0 0
  %274 = vmatprep.subr.bf16.mxu0 0
  %275 = vmatpush1.bf16.msra.mxu0 0
  %276 = vmatprep.subr.bf16.mxu0 0
  %277 = vmatpush1.bf16.msra.mxu0 0
  %278 = vmatprep.subr.bf16.mxu0 0
  %279 = vmatpush1.bf16.msra.mxu0 0
  %280 = vmatprep.subr.bf16.mxu0 0
  %281 = vmatpush1.bf16.msra.mxu0 0
  %282 = vmatprep.subr.bf16.mxu0 0
  %283 = vmatpush1.bf16.msra.mxu0 0
  %284 = vmatprep.mubr.bf16.mxu0 0
  %285 = vmatmul.mubr.bf16.gmra.mrb[0].mxu0 %v247
  %v286 = vpop.f32.mrb[0].mxu0
  %v287 = vadd.f32 %v198, %v286
  %v288 = vpop.f32.mrb[0].mxu0
  %v289 = vpop.f32.mrb[0].mxu0
  %v290 = vadd.f32 %v201, %v289
  %v291 = vpop.f32.mrb[0].mxu0
  %292 = vmatprep.mubr.bf16.mxu0 0
  %293 = vmatmul.mubr.bf16.gmra.mrb[0].mxu0 %v250
  %v294 = vpop.f32.mrb[0].mxu0
  %v295 = vadd.f32 %v206, %v294
  %v296 = vpop.f32.mrb[0].mxu0
  %v297 = vpop.f32.mrb[0].mxu0
  %v298 = vadd.f32 %v209, %v297
  %v299 = vpop.f32.mrb[0].mxu0
  %300 = vdwg.mxu0
  %v301 = vld [vmem:[%s0] sm:$0xe]
  %v302 = vld [vmem:[%s0 + $0xc] sm:$0xe]
  %vm307 = vcmask 1042432
  %vm308 = vcmask 1046532
  %vm309 = vmor %vm307, %vm308
  %v310 = vrot.slane %v301, 5
  %v311 = vrot.slane %v310, 4
  %v312 = vrot.slane %v53, 5
  %v313 = vsel %vm309, %v311, %v312
  %v314 = vrot.slane %v312, 4
  %v315 = vrot.slane %v64, 5
  %v316 = vsel %vm309, %v314, %v315
  %v317 = vrot.slane %v302, 5
  %v318 = vrot.slane %v317, 4
  %v319 = vrot.slane %v55, 5
  %v320 = vsel %vm309, %v318, %v319
  %v321 = vrot.slane %v319, 4
  %v322 = vrot.slane %v65, 5
  %v323 = vsel %vm309, %v321, %v322
  %s324 = scalar_lea.vmem %s1, 64
  %v325 = vld [vmem:[%s324] sm:$0xf]
  %v326 = vld [vmem:[%s324 + $0x4] sm:$0xf]
  %v327 = vld [vmem:[%s324 + $0x8] sm:$0xf]
  %v328 = vld [vmem:[%s324 + $0xc] sm:$0xf]
  %v329 = vld [vmem:[%s324 + $0x10] sm:$0xf]
  %v330 = vld [vmem:[%s324 + $0x14] sm:$0xf]
  %v331 = vld [vmem:[%s324 + $0x18] sm:$0xf]
  %v332 = vld [vmem:[%s324 + $0x1c] sm:$0xf]
  %v333 = vunpack.c.l.b16 %v313
  %v334 = vunpack.c.l.b16 %v316
  %v335 = vunpack.c.l.b16 %v320
  %v336 = vunpack.c.l.b16 %v323
  %v337 = vpack.c.b16 %v334, %v333
  %v338 = vpack.c.b16 %v336, %v335
  %v347 = vunpack.c.l.b16 %v325
  %v348 = vunpack.c.l.b16 %v326
  %v349 = vunpack.c.l.b16 %v327
  %v350 = vunpack.c.l.b16 %v328
  %v351 = vunpack.c.l.b16 %v329
  %v352 = vunpack.c.l.b16 %v330
  %v353 = vunpack.c.l.b16 %v331
  %v354 = vunpack.c.l.b16 %v332
  %v355 = vpack.c.b16 %v348, %v347
  %v356 = vpack.c.b16 %v350, %v349
  %v357 = vpack.c.b16 %v352, %v351
  %v358 = vpack.c.b16 %v354, %v353
  %v364 = vsel %vm156, %v337, 0
  %v367 = vsel %vm156, %v338, 0
  %369 = vmatprep.subr.bf16.mxu0 0
  %370 = vmatpush1.bf16.msra.mxu0 %v355
  %371 = vmatprep.subr.bf16.mxu0 0
  %372 = vmatpush1.bf16.msra.mxu0 %v356
  %373 = vmatprep.subr.bf16.mxu0 0
  %374 = vmatpush1.bf16.msra.mxu0 %v357
  %375 = vmatprep.subr.bf16.mxu0 0
  %376 = vmatpush1.bf16.msra.mxu0 %v358
  %377 = vmatprep.subr.bf16.mxu0 0
  %378 = vmatpush1.bf16.msra.mxu0 0
  %379 = vmatprep.subr.bf16.mxu0 0
  %380 = vmatpush1.bf16.msra.mxu0 0
  %381 = vmatprep.subr.bf16.mxu0 0
  %382 = vmatpush1.bf16.msra.mxu0 0
  %383 = vmatprep.subr.bf16.mxu0 0
  %384 = vmatpush1.bf16.msra.mxu0 0
  %385 = vmatprep.subr.bf16.mxu0 0
  %386 = vmatpush1.bf16.msra.mxu0 0
  %387 = vmatprep.subr.bf16.mxu0 0
  %388 = vmatpush1.bf16.msra.mxu0 0
  %389 = vmatprep.subr.bf16.mxu0 0
  %390 = vmatpush1.bf16.msra.mxu0 0
  %391 = vmatprep.subr.bf16.mxu0 0
  %392 = vmatpush1.bf16.msra.mxu0 0
  %393 = vmatprep.subr.bf16.mxu0 0
  %394 = vmatpush1.bf16.msra.mxu0 0
  %395 = vmatprep.subr.bf16.mxu0 0
  %396 = vmatpush1.bf16.msra.mxu0 0
  %397 = vmatprep.subr.bf16.mxu0 0
  %398 = vmatpush1.bf16.msra.mxu0 0
  %399 = vmatprep.subr.bf16.mxu0 0
  %400 = vmatpush1.bf16.msra.mxu0 0
  %401 = vmatprep.mubr.bf16.mxu0 0
  %402 = vmatmul.mubr.bf16.gmra.mrb[0].mxu0 %v364
  %v403 = vpop.f32.mrb[0].mxu0
  %v404 = vadd.f32 0.0, %v403
  %v405 = vpop.f32.mrb[0].mxu0
  %v406 = vpop.f32.mrb[0].mxu0
  %v407 = vadd.f32 0.0, %v406
  %v408 = vpop.f32.mrb[0].mxu0
  %409 = vmatprep.mubr.bf16.mxu0 0
  %410 = vmatmul.mubr.bf16.gmra.mrb[0].mxu0 %v367
  %v411 = vpop.f32.mrb[0].mxu0
  %v412 = vadd.f32 0.0, %v411
  %v413 = vpop.f32.mrb[0].mxu0
  %v414 = vpop.f32.mrb[0].mxu0
  %v415 = vadd.f32 0.0, %v414
  %v416 = vpop.f32.mrb[0].mxu0
  %417 = vdwg.mxu0
  %v418 = vadd.f32 %v287, %v404
  %v419 = vadd.f32 %v290, %v407
  %v420 = vadd.f32 %v295, %v412
  %v421 = vadd.f32 %v298, %v415
  %v422 = vld [vmem:[%s4] sm:$0x1]
  %v424 = vlaneseq
  %v425 = vshrl.u32 %v424, 7
  %v426 = vsub.s32 0, %v425
  %v427 = vrot.slane %v422, %v426
  %v429 = vadd.f32 %v418, %v427
  %v430 = vadd.f32 %v419, %v427
  %v431 = vadd.f32 %v420, %v427
  %v432 = vadd.f32 %v421, %v427
  %v433 = vadd.f32 %v429, %v430
  %v434 = vadd.f32 %v433, %v431
  %v435 = vadd.f32 %v434, %v432
  %v436 = vrot.slane %v435, 4
  %v437 = vadd.f32 %v435, %v436
  %v438 = vrot.slane %v437, 2
  %v439 = vadd.f32 %v437, %v438
  %v440 = vrot.slane %v439, 1
  %v441 = vadd.f32 %v439, %v440
  %v442 = vmul.f32 %v429, %v429
  %v443 = vmul.f32 %v430, %v430
  %v444 = vmul.f32 %v431, %v431
  %v445 = vmul.f32 %v432, %v432
  %v446 = vadd.f32 %v442, %v443
  %v447 = vadd.f32 %v446, %v444
  %v448 = vadd.f32 %v447, %v445
  %v449 = vrot.slane %v448, 4
  %v450 = vadd.f32 %v448, %v449
  %v451 = vrot.slane %v450, 2
  %v452 = vadd.f32 %v450, %v451
  %v453 = vrot.slane %v452, 1
  %v454 = vadd.f32 %v452, %v453
  %455 = vmatprep.subr.mxu0 0.0
  %456 = vmatpush1.msra.mxu0 %v36
  %457 = vmatprep.subr.mxu0 0.0
  %458 = vmatpush1.msra.mxu0 %v37
  %459 = vmatprep.subr.mxu0 0.0
  %460 = vmatpush1.msra.mxu0 %v38
  %461 = vmatprep.subr.mxu0 0.0
  %462 = vmatpush1.msra.mxu0 %v39
  %463 = vmatprep.subr.mxu0 0.0
  %464 = vmatpush1.msra.mxu0 %v40
  %465 = vmatprep.subr.mxu0 0.0
  %466 = vmatpush1.msra.mxu0 %v41
  %467 = vmatprep.subr.mxu0 0.0
  %468 = vmatpush1.msra.mxu0 %v42
  %469 = vmatprep.subr.mxu0 0.0
  %470 = vmatpush1.msra.mxu0 %v43
  %471 = vmatprep.subr.mxu0 0.0
  %472 = vmatpush1.msra.mxu0 %v44
  %473 = vmatprep.subr.mxu0 0.0
  %474 = vmatpush1.msra.mxu0 %v45
  %475 = vmatprep.subr.mxu0 0.0
  %476 = vmatpush1.msra.mxu0 %v46
  %477 = vmatprep.subr.mxu0 0.0
  %478 = vmatpush1.msra.mxu0 %v47
  %479 = vmatprep.subr.mxu0 0.0
  %480 = vmatpush1.msra.mxu0 %v48
  %481 = vmatprep.subr.mxu0 0.0
  %482 = vmatpush1.msra.mxu0 %v49
  %483 = vmatprep.subr.mxu0 0.0
  %484 = vmatpush1.msra.mxu0 %v50
  %485 = vmatprep.subr.mxu0 0.0
  %486 = vmatpush1.msra.mxu0 %v51
  %487 = vmatprep.subr.mxu0 0.0
  %488 = vmatpush1.msra.mxu0 0.0
  %489 = vmatprep.subr.mxu0 0.0
  %490 = vmatpush1.msra.mxu0 0.0
  %491 = vmatprep.subr.mxu0 0.0
  %492 = vmatpush1.msra.mxu0 0.0
  %493 = vmatprep.subr.mxu0 0.0
  %494 = vmatpush1.msra.mxu0 0.0
  %495 = vmatprep.subr.mxu0 0.0
  %496 = vmatpush1.msra.mxu0 0.0
  %497 = vmatprep.subr.mxu0 0.0
  %498 = vmatpush1.msra.mxu0 0.0
  %499 = vmatprep.subr.mxu0 0.0
  %500 = vmatpush1.msra.mxu0 0.0
  %501 = vmatprep.subr.mxu0 0.0
  %502 = vmatpush1.msra.mxu0 0.0
  %503 = vmatprep.subr.mxu0 0.0
  %504 = vmatpush1.msra.mxu0 0.0
  %505 = vmatprep.subr.mxu0 0.0
  %506 = vmatpush1.msra.mxu0 0.0
  %507 = vmatprep.subr.mxu0 0.0
  %508 = vmatpush1.msra.mxu0 0.0
  %509 = vmatprep.subr.mxu0 0.0
  %510 = vmatpush1.msra.mxu0 0.0
  %511 = vmatprep.subr.mxu0 0.0
  %512 = vmatpush1.msra.mxu0 0.0
  %513 = vmatprep.subr.mxu0 0.0
  %514 = vmatpush1.msra.mxu0 0.0
  %515 = vmatprep.subr.mxu0 0.0
  %516 = vmatpush1.msra.mxu0 0.0
  %517 = vmatprep.subr.mxu0 0.0
  %518 = vmatpush1.msra.mxu0 0.0
  %519 = vmatprep.mubr.f32.mxu0 0.0
  %520 = vmatmul.mubr.f32.gmra.mrb[0].mxu0 %v441
  %v521 = vpop.f32.mrb[0].mxu0
  %v522 = vadd.f32 0.0, %v521
  %v523 = vpop.f32.mrb[0].mxu0
  %524 = vdwg.mxu0
  %v525 = vrcp.pop 512.0
  %v526 = vmul.f32 %v522, %v525
  %527 = vmatprep.subr.mxu0 0.0
  %528 = vmatpush1.msra.mxu0 %v36
  %529 = vmatprep.subr.mxu0 0.0
  %530 = vmatpush1.msra.mxu0 %v37
  %531 = vmatprep.subr.mxu0 0.0
  %532 = vmatpush1.msra.mxu0 %v38
  %533 = vmatprep.subr.mxu0 0.0
  %534 = vmatpush1.msra.mxu0 %v39
  %535 = vmatprep.subr.mxu0 0.0
  %536 = vmatpush1.msra.mxu0 %v40
  %537 = vmatprep.subr.mxu0 0.0
  %538 = vmatpush1.msra.mxu0 %v41
  %539 = vmatprep.subr.mxu0 0.0
  %540 = vmatpush1.msra.mxu0 %v42
  %541 = vmatprep.subr.mxu0 0.0
  %542 = vmatpush1.msra.mxu0 %v43
  %543 = vmatprep.subr.mxu0 0.0
  %544 = vmatpush1.msra.mxu0 %v44
  %545 = vmatprep.subr.mxu0 0.0
  %546 = vmatpush1.msra.mxu0 %v45
  %547 = vmatprep.subr.mxu0 0.0
  %548 = vmatpush1.msra.mxu0 %v46
  %549 = vmatprep.subr.mxu0 0.0
  %550 = vmatpush1.msra.mxu0 %v47
  %551 = vmatprep.subr.mxu0 0.0
  %552 = vmatpush1.msra.mxu0 %v48
  %553 = vmatprep.subr.mxu0 0.0
  %554 = vmatpush1.msra.mxu0 %v49
  %555 = vmatprep.subr.mxu0 0.0
  %556 = vmatpush1.msra.mxu0 %v50
  %557 = vmatprep.subr.mxu0 0.0
  %558 = vmatpush1.msra.mxu0 %v51
  %559 = vmatprep.subr.mxu0 0.0
  %560 = vmatpush1.msra.mxu0 0.0
  %561 = vmatprep.subr.mxu0 0.0
  %562 = vmatpush1.msra.mxu0 0.0
  %563 = vmatprep.subr.mxu0 0.0
  %564 = vmatpush1.msra.mxu0 0.0
  %565 = vmatprep.subr.mxu0 0.0
  %566 = vmatpush1.msra.mxu0 0.0
  %567 = vmatprep.subr.mxu0 0.0
  %568 = vmatpush1.msra.mxu0 0.0
  %569 = vmatprep.subr.mxu0 0.0
  %570 = vmatpush1.msra.mxu0 0.0
  %571 = vmatprep.subr.mxu0 0.0
  %572 = vmatpush1.msra.mxu0 0.0
  %573 = vmatprep.subr.mxu0 0.0
  %574 = vmatpush1.msra.mxu0 0.0
  %575 = vmatprep.subr.mxu0 0.0
  %576 = vmatpush1.msra.mxu0 0.0
  %577 = vmatprep.subr.mxu0 0.0
  %578 = vmatpush1.msra.mxu0 0.0
  %579 = vmatprep.subr.mxu0 0.0
  %580 = vmatpush1.msra.mxu0 0.0
  %581 = vmatprep.subr.mxu0 0.0
  %582 = vmatpush1.msra.mxu0 0.0
  %583 = vmatprep.subr.mxu0 0.0
  %584 = vmatpush1.msra.mxu0 0.0
  %585 = vmatprep.subr.mxu0 0.0
  %586 = vmatpush1.msra.mxu0 0.0
  %587 = vmatprep.subr.mxu0 0.0
  %588 = vmatpush1.msra.mxu0 0.0
  %589 = vmatprep.subr.mxu0 0.0
  %590 = vmatpush1.msra.mxu0 0.0
  %591 = vmatprep.mubr.f32.mxu0 0.0
  %592 = vmatmul.mubr.f32.gmra.mrb[0].mxu0 %v454
  %v593 = vpop.f32.mrb[0].mxu0
  %v594 = vadd.f32 0.0, %v593
  %v595 = vpop.f32.mrb[0].mxu0
  %596 = vdwg.mxu0
  %v597 = vmul.f32 %v594, %v525
  %v598 = vmul.f32 %v526, %v526
  %v599 = vsub.f32 %v597, %v598
  %v600 = vmax.f32 %v599, 0.0
  %v601 = vadd.f32 %v600, 1e-05
  %v602 = vrsqrt.pop %v601
  %v603 = vld [vmem:[%s7] sm:$0x1]
  %v604 = vmul.f32 %v603, %v602
  %v605 = vld [vmem:[%s8] sm:$0x1]
  %v606 = vmul.f32 %v526, %v604
  %v607 = vsub.f32 %v605, %v606
  %v609 = vlaneseq
  %v610 = vshrl.u32 %v609, 7
  %v611 = vsub.s32 0, %v610
  %v612 = vrot.slane %v604, %v611
  %v614 = vmul.f32 %v429, %v612
  %v615 = vmul.f32 %v430, %v612
  %v616 = vmul.f32 %v431, %v612
  %v617 = vmul.f32 %v432, %v612
  %v619 = vlaneseq
  %v620 = vshrl.u32 %v619, 7
  %v621 = vsub.s32 0, %v620
  %v622 = vrot.slane %v607, %v621
  %v624 = vadd.f32 %v614, %v622
  %v625 = vadd.f32 %v615, %v622
  %v626 = vadd.f32 %v616, %v622
  %v627 = vadd.f32 %v617, %v622
  %v628 = vmax.f32 %v624, 0.0
  %v629 = vmax.f32 %v625, 0.0
  %v630 = vmax.f32 %v626, 0.0
  %v631 = vmax.f32 %v627, 0.0
  %v632 = vpack.c.bf16 %v629, %v628
  %v633 = vpack.c.bf16 %v631, %v630
  %vm634 = vcmask 1040384
  %vm635 = vsmask.f32 256
  %vm636 = vmand %vm634, %vm635
  %v637 = vld [vmem:[#allocation2] sm:$0x1]
  %v638 = vsel %vm636, 0, %v637
  %639 = vst [vmem:[#allocation2] sm:$0x1] %v638
  %v640 = vld [vmem:[#allocation2 + $0xc] sm:$0x1]
  %v641 = vsel %vm636, 0, %v640
  %642 = vst [vmem:[#allocation2 + $0xc] sm:$0x1] %v641
  %vm643 = vsmask.f32 7938
  %vm644 = vmand %vm634, %vm643
  %v645 = vld [vmem:[#allocation2 + $0x8] sm:$0x1]
  %v646 = vsel %vm644, 0, %v645
  %647 = vst [vmem:[#allocation2 + $0x8] sm:$0x1] %v646
  %v648 = vld [vmem:[#allocation2 + $0x14] sm:$0x1]
  %v649 = vsel %vm644, 0, %v648
  %650 = vst [vmem:[#allocation2 + $0x14] sm:$0x1] %v649
  %v653 = vunpack.c.l.b16 %v632
  %v654 = vunpack.c.h.b16 %v632
  %v655 = vunpack.c.l.b16 %v633
  %v656 = vunpack.c.h.b16 %v633
  %v657 = vpack.c.b16 %v653, %v653
  %v658 = vpack.c.b16 %v654, %v654
  %v659 = vpack.c.b16 %v655, %v655
  %v660 = vpack.c.b16 %v656, %v656
  %vm661 = vsmask.f32 4368
  %vm662 = vmor %vm635, %vm661
  %v664 = vshrl.u32 %v657, 16
  %v666 = vrot.slane %v664, 7
  %v667 = vshll.u32 %v657, 16
  %v669 = vor.u32 %v666, %v667
  %v670 = vrot.slane %v666, 4
  %v672 = vshrl.u32 %v658, 16
  %v674 = vrot.slane %v672, 7
  %v675 = vshll.u32 %v658, 16
  %v677 = vor.u32 %v674, %v675
  %v678 = vsel %vm662, %v670, %v677
  %v679 = vrot.slane %v674, 4
  %v681 = vshrl.u32 %v659, 16
  %v683 = vrot.slane %v681, 7
  %v684 = vshll.u32 %v659, 16
  %v686 = vor.u32 %v683, %v684
  %v687 = vrot.slane %v683, 4
  %v689 = vshrl.u32 %v660, 16
  %v691 = vrot.slane %v689, 7
  %v692 = vshll.u32 %v660, 16
  %v694 = vor.u32 %v691, %v692
  %v695 = vsel %vm662, %v687, %v694
  %v696 = vrot.slane %v691, 4
  %vm703 = vcmask 1043456
  %vm704 = vmand %vm703, %vm643
  %v705 = vld [vmem:[#allocation2] sm:$0xf]
  %v706 = vsel %vm704, %v669, %v705
  %707 = vst [vmem:[#allocation2] sm:$0xf] %v706
  %708 = vst [vmem:[#allocation2 + $0x4] sm:$0xf] %v678
  %v709 = vld [vmem:[#allocation2 + $0x8] sm:$0x1]
  %v710 = vsel %vm636, %v679, %v709
  %711 = vst [vmem:[#allocation2 + $0x8] sm:$0x1] %v710
  %v712 = vld [vmem:[#allocation2 + $0xc] sm:$0xf]
  %v713 = vsel %vm704, %v686, %v712
  %714 = vst [vmem:[#allocation2 + $0xc] sm:$0xf] %v713
  %715 = vst [vmem:[#allocation2 + $0x10] sm:$0xf] %v695
  %v716 = vld [vmem:[#allocation2 + $0x14] sm:$0x1]
  %v717 = vsel %vm636, %v696, %v716
  %718 = vst [vmem:[#allocation2 + $0x14] sm:$0x1] %v717
  %v719 = vld [vmem:[#allocation2] sm:$0xf]
  %v720 = vld [vmem:[#allocation2 + $0x4] sm:$0xf]
  %v721 = vld [vmem:[#allocation2 + $0xc] sm:$0xf]
  %v722 = vld [vmem:[#allocation2 + $0x10] sm:$0xf]
  %v723 = vld [vmem:[%s2] sm:$0xf]
  %v724 = vld [vmem:[%s2 + $0x4] sm:$0xf]
  %v725 = vld [vmem:[%s2 + $0x8] sm:$0xf]
  %v726 = vld [vmem:[%s2 + $0xc] sm:$0xf]
  %v727 = vld [vmem:[%s2 + $0x10] sm:$0xf]
  %v728 = vld [vmem:[%s2 + $0x14] sm:$0xf]
  %v729 = vld [vmem:[%s2 + $0x18] sm:$0xf]
  %v730 = vld [vmem:[%s2 + $0x1c] sm:$0xf]
  %v731 = vld [vmem:[%s2 + $0x20] sm:$0xf]
  %v732 = vld [vmem:[%s2 + $0x24] sm:$0xf]
  %v733 = vld [vmem:[%s2 + $0x28] sm:$0xf]
  %v734 = vld [vmem:[%s2 + $0x2c] sm:$0xf]
  %v735 = vld [vmem:[%s2 + $0x30] sm:$0xf]
  %v736 = vld [vmem:[%s2 + $0x34] sm:$0xf]
  %v737 = vld [vmem:[%s2 + $0x38] sm:$0xf]
  %v738 = vld [vmem:[%s2 + $0x3c] sm:$0xf]
  %v739 = vld [vmem:[#allocation2 + $0x8] sm:$0x1]
  %v740 = vld [vmem:[#allocation2 + $0x14] sm:$0x1]
  %v742 = vshrl.u32 %v719, 16
  %v744 = vrot.slane %v742, 4
  %v745 = vshll.u32 %v719, 16
  %v747 = vrot.slane %v745, 5
  %v748 = vor.u32 %v744, %v747
  %v749 = vrot.slane %v748, 4
  %v751 = vshll.u32 %v720, 16
  %v753 = vrot.slane %v751, 5
  %v754 = vsel %vm68, %v749, %v753
  %v755 = vshrl.u32 %v720, 16
  %v757 = vrot.slane %v755, 4
  %v758 = vor.u32 %v757, %v753
  %v759 = vrot.slane %v758, 4
  %v761 = vshll.u32 %v739, 16
  %v763 = vrot.slane %v761, 5
  %v764 = vsel %vm68, %v759, %v763
  %v766 = vshrl.u32 %v721, 16
  %v768 = vrot.slane %v766, 4
  %v769 = vshll.u32 %v721, 16
  %v771 = vrot.slane %v769, 5
  %v772 = vor.u32 %v768, %v771
  %v773 = vrot.slane %v772, 4
  %v775 = vshll.u32 %v722, 16
  %v777 = vrot.slane %v775, 5
  %v778 = vsel %vm68, %v773, %v777
  %v779 = vshrl.u32 %v722, 16
  %v781 = vrot.slane %v779, 4
  %v782 = vor.u32 %v781, %v777
  %v783 = vrot.slane %v782, 4
  %v785 = vshll.u32 %v740, 16
  %v787 = vrot.slane %v785, 5
  %v788 = vsel %vm68, %v783, %v787
  %s789 = scalar_lea.vmem %s2, 64
  %v790 = vld [vmem:[%s789] sm:$0xf]
  %v791 = vld [vmem:[%s789 + $0x4] sm:$0xf]
  %v792 = vld [vmem:[%s789 + $0x8] sm:$0xf]
  %v793 = vld [vmem:[%s789 + $0xc] sm:$0xf]
  %v794 = vld [vmem:[%s789 + $0x10] sm:$0xf]
  %v795 = vld [vmem:[%s789 + $0x14] sm:$0xf]
  %v796 = vld [vmem:[%s789 + $0x18] sm:$0xf]
  %v797 = vld [vmem:[%s789 + $0x1c] sm:$0xf]
  %v798 = vld [vmem:[%s789 + $0x20] sm:$0xf]
  %v799 = vld [vmem:[%s789 + $0x24] sm:$0xf]
  %v800 = vld [vmem:[%s789 + $0x28] sm:$0xf]
  %v801 = vld [vmem:[%s789 + $0x2c] sm:$0xf]
  %v802 = vld [vmem:[%s789 + $0x30] sm:$0xf]
  %v803 = vld [vmem:[%s789 + $0x34] sm:$0xf]
  %v804 = vld [vmem:[%s789 + $0x38] sm:$0xf]
  %v805 = vld [vmem:[%s789 + $0x3c] sm:$0xf]
  %v806 = vunpack.c.l.b16 %v754
  %v807 = vunpack.c.l.b16 %v764
  %v808 = vunpack.c.l.b16 %v778
  %v809 = vunpack.c.l.b16 %v788
  %v810 = vpack.c.b16 %v807, %v806
  %v811 = vpack.c.b16 %v809, %v808
  %v830 = vunpack.c.l.b16 %v790
  %v831 = vunpack.c.l.b16 %v791
  %v832 = vunpack.c.l.b16 %v792
  %v833 = vunpack.c.l.b16 %v793
  %v834 = vunpack.c.l.b16 %v794
  %v835 = vunpack.c.l.b16 %v795
  %v836 = vunpack.c.l.b16 %v796
  %v837 = vunpack.c.l.b16 %v797
  %v838 = vunpack.c.l.b16 %v798
  %v839 = vunpack.c.l.b16 %v799
  %v840 = vunpack.c.l.b16 %v800
  %v841 = vunpack.c.l.b16 %v801
  %v842 = vunpack.c.l.b16 %v802
  %v843 = vunpack.c.l.b16 %v803
  %v844 = vunpack.c.l.b16 %v804
  %v845 = vunpack.c.l.b16 %v805
  %v846 = vpack.c.b16 %v831, %v830
  %v847 = vpack.c.b16 %v833, %v832
  %v848 = vpack.c.b16 %v835, %v834
  %v849 = vpack.c.b16 %v837, %v836
  %v850 = vpack.c.b16 %v839, %v838
  %v851 = vpack.c.b16 %v841, %v840
  %v852 = vpack.c.b16 %v843, %v842
  %v853 = vpack.c.b16 %v845, %v844
  %862 = vmatprep.subr.bf16.mxu0 0
  %863 = vmatpush1.bf16.msra.mxu0 %v846
  %864 = vmatprep.subr.bf16.mxu0 0
  %865 = vmatpush1.bf16.msra.mxu0 %v847
  %866 = vmatprep.subr.bf16.mxu0 0
  %867 = vmatpush1.bf16.msra.mxu0 %v848
  %868 = vmatprep.subr.bf16.mxu0 0
  %869 = vmatpush1.bf16.msra.mxu0 %v849
  %870 = vmatprep.subr.bf16.mxu0 0
  %871 = vmatpush1.bf16.msra.mxu0 %v850
  %872 = vmatprep.subr.bf16.mxu0 0
  %873 = vmatpush1.bf16.msra.mxu0 %v851
  %874 = vmatprep.subr.bf16.mxu0 0
  %875 = vmatpush1.bf16.msra.mxu0 %v852
  %876 = vmatprep.subr.bf16.mxu0 0
  %877 = vmatpush1.bf16.msra.mxu0 %v853
  %878 = vmatprep.subr.bf16.mxu0 0
  %879 = vmatpush1.bf16.msra.mxu0 0
  %880 = vmatprep.subr.bf16.mxu0 0
  %881 = vmatpush1.bf16.msra.mxu0 0
  %882 = vmatprep.subr.bf16.mxu0 0
  %883 = vmatpush1.bf16.msra.mxu0 0
  %884 = vmatprep.subr.bf16.mxu0 0
  %885 = vmatpush1.bf16.msra.mxu0 0
  %886 = vmatprep.subr.bf16.mxu0 0
  %887 = vmatpush1.bf16.msra.mxu0 0
  %888 = vmatprep.subr.bf16.mxu0 0
  %889 = vmatpush1.bf16.msra.mxu0 0
  %890 = vmatprep.subr.bf16.mxu0 0
  %891 = vmatpush1.bf16.msra.mxu0 0
  %892 = vmatprep.subr.bf16.mxu0 0
  %893 = vmatpush1.bf16.msra.mxu0 0
  %894 = vmatprep.mubr.bf16.mxu0 0
  %895 = vmatmul.mubr.bf16.gmra.mrb[0].mxu0 %v810
  %v896 = vpop.f32.mrb[0].mxu0
  %v897 = vadd.f32 0.0, %v896
  %v898 = vpop.f32.mrb[0].mxu0
  %v899 = vpop.f32.mrb[0].mxu0
  %v900 = vadd.f32 0.0, %v899
  %v901 = vpop.f32.mrb[0].mxu0
  %902 = vmatprep.mubr.bf16.mxu0 0
  %903 = vmatmul.mubr.bf16.gmra.mrb[0].mxu0 %v811
  %v904 = vpop.f32.mrb[0].mxu0
  %v905 = vadd.f32 0.0, %v904
  %v906 = vpop.f32.mrb[0].mxu0
  %v907 = vpop.f32.mrb[0].mxu0
  %v908 = vadd.f32 0.0, %v907
  %v909 = vpop.f32.mrb[0].mxu0
  %910 = vdwg.mxu0
  %v915 = vunpack.c.l.b16 %v719
  %v916 = vunpack.c.l.b16 %v720
  %v917 = vunpack.c.l.b16 %v721
  %v918 = vunpack.c.l.b16 %v722
  %v919 = vpack.c.b16 %v916, %v915
  %v920 = vpack.c.b16 %v918, %v917
  %v939 = vunpack.c.l.b16 %v723
  %v940 = vunpack.c.l.b16 %v724
  %v941 = vunpack.c.l.b16 %v725
  %v942 = vunpack.c.l.b16 %v726
  %v943 = vunpack.c.l.b16 %v727
  %v944 = vunpack.c.l.b16 %v728
  %v945 = vunpack.c.l.b16 %v729
  %v946 = vunpack.c.l.b16 %v730
  %v947 = vunpack.c.l.b16 %v731
  %v948 = vunpack.c.l.b16 %v732
  %v949 = vunpack.c.l.b16 %v733
  %v950 = vunpack.c.l.b16 %v734
  %v951 = vunpack.c.l.b16 %v735
  %v952 = vunpack.c.l.b16 %v736
  %v953 = vunpack.c.l.b16 %v737
  %v954 = vunpack.c.l.b16 %v738
  %v955 = vpack.c.b16 %v940, %v939
  %v956 = vpack.c.b16 %v942, %v941
  %v957 = vpack.c.b16 %v944, %v943
  %v958 = vpack.c.b16 %v946, %v945
  %v959 = vpack.c.b16 %v948, %v947
  %v960 = vpack.c.b16 %v950, %v949
  %v961 = vpack.c.b16 %v952, %v951
  %v962 = vpack.c.b16 %v954, %v953
  %971 = vmatprep.subr.bf16.mxu0 0
  %972 = vmatpush1.bf16.msra.mxu0 %v955
  %973 = vmatprep.subr.bf16.mxu0 0
  %974 = vmatpush1.bf16.msra.mxu0 %v956
  %975 = vmatprep.subr.bf16.mxu0 0
  %976 = vmatpush1.bf16.msra.mxu0 %v957
  %977 = vmatprep.subr.bf16.mxu0 0
  %978 = vmatpush1.bf16.msra.mxu0 %v958
  %979 = vmatprep.subr.bf16.mxu0 0
  %980 = vmatpush1.bf16.msra.mxu0 %v959
  %981 = vmatprep.subr.bf16.mxu0 0
  %982 = vmatpush1.bf16.msra.mxu0 %v960
  %983 = vmatprep.subr.bf16.mxu0 0
  %984 = vmatpush1.bf16.msra.mxu0 %v961
  %985 = vmatprep.subr.bf16.mxu0 0
  %986 = vmatpush1.bf16.msra.mxu0 %v962
  %987 = vmatprep.subr.bf16.mxu0 0
  %988 = vmatpush1.bf16.msra.mxu0 0
  %989 = vmatprep.subr.bf16.mxu0 0
  %990 = vmatpush1.bf16.msra.mxu0 0
  %991 = vmatprep.subr.bf16.mxu0 0
  %992 = vmatpush1.bf16.msra.mxu0 0
  %993 = vmatprep.subr.bf16.mxu0 0
  %994 = vmatpush1.bf16.msra.mxu0 0
  %995 = vmatprep.subr.bf16.mxu0 0
  %996 = vmatpush1.bf16.msra.mxu0 0
  %997 = vmatprep.subr.bf16.mxu0 0
  %998 = vmatpush1.bf16.msra.mxu0 0
  %999 = vmatprep.subr.bf16.mxu0 0
  %1000 = vmatpush1.bf16.msra.mxu0 0
  %1001 = vmatprep.subr.bf16.mxu0 0
  %1002 = vmatpush1.bf16.msra.mxu0 0
  %1003 = vmatprep.mubr.bf16.mxu0 0
  %1004 = vmatmul.mubr.bf16.gmra.mrb[0].mxu0 %v919
  %v1005 = vpop.f32.mrb[0].mxu0
  %v1006 = vadd.f32 %v897, %v1005
  %v1007 = vpop.f32.mrb[0].mxu0
  %v1008 = vpop.f32.mrb[0].mxu0
  %v1009 = vadd.f32 %v900, %v1008
  %v1010 = vpop.f32.mrb[0].mxu0
  %1011 = vmatprep.mubr.bf16.mxu0 0
  %1012 = vmatmul.mubr.bf16.gmra.mrb[0].mxu0 %v920
  %v1013 = vpop.f32.mrb[0].mxu0
  %v1014 = vadd.f32 %v905, %v1013
  %v1015 = vpop.f32.mrb[0].mxu0
  %v1016 = vpop.f32.mrb[0].mxu0
  %v1017 = vadd.f32 %v908, %v1016
  %v1018 = vpop.f32.mrb[0].mxu0
  %1019 = vdwg.mxu0
  %v1020 = vld [vmem:[#allocation2] sm:$0xe]
  %v1021 = vld [vmem:[#allocation2 + $0xc] sm:$0xe]
  %v1026 = vrot.slane %v1020, 5
  %v1027 = vrot.slane %v1026, 4
  %v1028 = vrot.slane %v720, 5
  %v1029 = vsel %vm309, %v1027, %v1028
  %v1030 = vrot.slane %v1028, 4
  %v1031 = vrot.slane %v739, 5
  %v1032 = vsel %vm309, %v1030, %v1031
  %v1033 = vrot.slane %v1021, 5
  %v1034 = vrot.slane %v1033, 4
  %v1035 = vrot.slane %v722, 5
  %v1036 = vsel %vm309, %v1034, %v1035
  %v1037 = vrot.slane %v1035, 4
  %v1038 = vrot.slane %v740, 5
  %v1039 = vsel %vm309, %v1037, %v1038
  %s1040 = scalar_lea.vmem %s2, 128
  %v1041 = vld [vmem:[%s1040] sm:$0xf]
  %v1042 = vld [vmem:[%s1040 + $0x4] sm:$0xf]
  %v1043 = vld [vmem:[%s1040 + $0x8] sm:$0xf]
  %v1044 = vld [vmem:[%s1040 + $0xc] sm:$0xf]
  %v1045 = vld [vmem:[%s1040 + $0x10] sm:$0xf]
  %v1046 = vld [vmem:[%s1040 + $0x14] sm:$0xf]
  %v1047 = vld [vmem:[%s1040 + $0x18] sm:$0xf]
  %v1048 = vld [vmem:[%s1040 + $0x1c] sm:$0xf]
  %v1049 = vld [vmem:[%s1040 + $0x20] sm:$0xf]
  %v1050 = vld [vmem:[%s1040 + $0x24] sm:$0xf]
  %v1051 = vld [vmem:[%s1040 + $0x28] sm:$0xf]
  %v1052 = vld [vmem:[%s1040 + $0x2c] sm:$0xf]
  %v1053 = vld [vmem:[%s1040 + $0x30] sm:$0xf]
  %v1054 = vld [vmem:[%s1040 + $0x34] sm:$0xf]
  %v1055 = vld [vmem:[%s1040 + $0x38] sm:$0xf]
  %v1056 = vld [vmem:[%s1040 + $0x3c] sm:$0xf]
  %v1057 = vunpack.c.l.b16 %v1029
  %v1058 = vunpack.c.l.b16 %v1032
  %v1059 = vunpack.c.l.b16 %v1036
  %v1060 = vunpack.c.l.b16 %v1039
  %v1061 = vpack.c.b16 %v1058, %v1057
  %v1062 = vpack.c.b16 %v1060, %v1059
  %v1081 = vunpack.c.l.b16 %v1041
  %v1082 = vunpack.c.l.b16 %v1042
  %v1083 = vunpack.c.l.b16 %v1043
  %v1084 = vunpack.c.l.b16 %v1044
  %v1085 = vunpack.c.l.b16 %v1045
  %v1086 = vunpack.c.l.b16 %v1046
  %v1087 = vunpack.c.l.b16 %v1047
  %v1088 = vunpack.c.l.b16 %v1048
  %v1089 = vunpack.c.l.b16 %v1049
  %v1090 = vunpack.c.l.b16 %v1050
  %v1091 = vunpack.c.l.b16 %v1051
  %v1092 = vunpack.c.l.b16 %v1052
  %v1093 = vunpack.c.l.b16 %v1053
  %v1094 = vunpack.c.l.b16 %v1054
  %v1095 = vunpack.c.l.b16 %v1055
  %v1096 = vunpack.c.l.b16 %v1056
  %v1097 = vpack.c.b16 %v1082, %v1081
  %v1098 = vpack.c.b16 %v1084, %v1083
  %v1099 = vpack.c.b16 %v1086, %v1085
  %v1100 = vpack.c.b16 %v1088, %v1087
  %v1101 = vpack.c.b16 %v1090, %v1089
  %v1102 = vpack.c.b16 %v1092, %v1091
  %v1103 = vpack.c.b16 %v1094, %v1093
  %v1104 = vpack.c.b16 %v1096, %v1095
  %1113 = vmatprep.subr.bf16.mxu0 0
  %1114 = vmatpush1.bf16.msra.mxu0 %v1097
  %1115 = vmatprep.subr.bf16.mxu0 0
  %1116 = vmatpush1.bf16.msra.mxu0 %v1098
  %1117 = vmatprep.subr.bf16.mxu0 0
  %1118 = vmatpush1.bf16.msra.mxu0 %v1099
  %1119 = vmatprep.subr.bf16.mxu0 0
  %1120 = vmatpush1.bf16.msra.mxu0 %v1100
  %1121 = vmatprep.subr.bf16.mxu0 0
  %1122 = vmatpush1.bf16.msra.mxu0 %v1101
  %1123 = vmatprep.subr.bf16.mxu0 0
  %1124 = vmatpush1.bf16.msra.mxu0 %v1102
  %1125 = vmatprep.subr.bf16.mxu0 0
  %1126 = vmatpush1.bf16.msra.mxu0 %v1103
  %1127 = vmatprep.subr.bf16.mxu0 0
  %1128 = vmatpush1.bf16.msra.mxu0 %v1104
  %1129 = vmatprep.subr.bf16.mxu0 0
  %1130 = vmatpush1.bf16.msra.mxu0 0
  %1131 = vmatprep.subr.bf16.mxu0 0
  %1132 = vmatpush1.bf16.msra.mxu0 0
  %1133 = vmatprep.subr.bf16.mxu0 0
  %1134 = vmatpush1.bf16.msra.mxu0 0
  %1135 = vmatprep.subr.bf16.mxu0 0
  %1136 = vmatpush1.bf16.msra.mxu0 0
  %1137 = vmatprep.subr.bf16.mxu0 0
  %1138 = vmatpush1.bf16.msra.mxu0 0
  %1139 = vmatprep.subr.bf16.mxu0 0
  %1140 = vmatpush1.bf16.msra.mxu0 0
  %1141 = vmatprep.subr.bf16.mxu0 0
  %1142 = vmatpush1.bf16.msra.mxu0 0
  %1143 = vmatprep.subr.bf16.mxu0 0
  %1144 = vmatpush1.bf16.msra.mxu0 0
  %1145 = vmatprep.mubr.bf16.mxu0 0
  %1146 = vmatmul.mubr.bf16.gmra.mrb[0].mxu0 %v1061
  %v1147 = vpop.f32.mrb[0].mxu0
  %v1148 = vadd.f32 0.0, %v1147
  %v1149 = vpop.f32.mrb[0].mxu0
  %v1150 = vpop.f32.mrb[0].mxu0
  %v1151 = vadd.f32 0.0, %v1150
  %v1152 = vpop.f32.mrb[0].mxu0
  %1153 = vmatprep.mubr.bf16.mxu0 0
  %1154 = vmatmul.mubr.bf16.gmra.mrb[0].mxu0 %v1062
  %v1155 = vpop.f32.mrb[0].mxu0
  %v1156 = vadd.f32 0.0, %v1155
  %v1157 = vpop.f32.mrb[0].mxu0
  %v1158 = vpop.f32.mrb[0].mxu0
  %v1159 = vadd.f32 0.0, %v1158
  %v1160 = vpop.f32.mrb[0].mxu0
  %1161 = vdwg.mxu0
  %v1162 = vadd.f32 %v1006, %v1148
  %v1163 = vadd.f32 %v1009, %v1151
  %v1164 = vadd.f32 %v1014, %v1156
  %v1165 = vadd.f32 %v1017, %v1159
  %v1166 = vld [vmem:[%s5] sm:$0x1]
  %v1168 = vlaneseq
  %v1169 = vshrl.u32 %v1168, 7
  %v1170 = vsub.s32 0, %v1169
  %v1171 = vrot.slane %v1166, %v1170
  %v1173 = vadd.f32 %v1162, %v1171
  %v1174 = vadd.f32 %v1163, %v1171
  %v1175 = vadd.f32 %v1164, %v1171
  %v1176 = vadd.f32 %v1165, %v1171
  %v1177 = vadd.f32 %v1173, %v1174
  %v1178 = vadd.f32 %v1177, %v1175
  %v1179 = vadd.f32 %v1178, %v1176
  %v1180 = vrot.slane %v1179, 4
  %v1181 = vadd.f32 %v1179, %v1180
  %v1182 = vrot.slane %v1181, 2
  %v1183 = vadd.f32 %v1181, %v1182
  %v1184 = vrot.slane %v1183, 1
  %v1185 = vadd.f32 %v1183, %v1184
  %v1186 = vmul.f32 %v1173, %v1173
  %v1187 = vmul.f32 %v1174, %v1174
  %v1188 = vmul.f32 %v1175, %v1175
  %v1189 = vmul.f32 %v1176, %v1176
  %v1190 = vadd.f32 %v1186, %v1187
  %v1191 = vadd.f32 %v1190, %v1188
  %v1192 = vadd.f32 %v1191, %v1189
  %v1193 = vrot.slane %v1192, 4
  %v1194 = vadd.f32 %v1192, %v1193
  %v1195 = vrot.slane %v1194, 2
  %v1196 = vadd.f32 %v1194, %v1195
  %v1197 = vrot.slane %v1196, 1
  %v1198 = vadd.f32 %v1196, %v1197
  %1199 = vmatprep.subr.mxu0 0.0
  %1200 = vmatpush1.msra.mxu0 %v36
  %1201 = vmatprep.subr.mxu0 0.0
  %1202 = vmatpush1.msra.mxu0 %v37
  %1203 = vmatprep.subr.mxu0 0.0
  %1204 = vmatpush1.msra.mxu0 %v38
  %1205 = vmatprep.subr.mxu0 0.0
  %1206 = vmatpush1.msra.mxu0 %v39
  %1207 = vmatprep.subr.mxu0 0.0
  %1208 = vmatpush1.msra.mxu0 %v40
  %1209 = vmatprep.subr.mxu0 0.0
  %1210 = vmatpush1.msra.mxu0 %v41
  %1211 = vmatprep.subr.mxu0 0.0
  %1212 = vmatpush1.msra.mxu0 %v42
  %1213 = vmatprep.subr.mxu0 0.0
  %1214 = vmatpush1.msra.mxu0 %v43
  %1215 = vmatprep.subr.mxu0 0.0
  %1216 = vmatpush1.msra.mxu0 %v44
  %1217 = vmatprep.subr.mxu0 0.0
  %1218 = vmatpush1.msra.mxu0 %v45
  %1219 = vmatprep.subr.mxu0 0.0
  %1220 = vmatpush1.msra.mxu0 %v46
  %1221 = vmatprep.subr.mxu0 0.0
  %1222 = vmatpush1.msra.mxu0 %v47
  %1223 = vmatprep.subr.mxu0 0.0
  %1224 = vmatpush1.msra.mxu0 %v48
  %1225 = vmatprep.subr.mxu0 0.0
  %1226 = vmatpush1.msra.mxu0 %v49
  %1227 = vmatprep.subr.mxu0 0.0
  %1228 = vmatpush1.msra.mxu0 %v50
  %1229 = vmatprep.subr.mxu0 0.0
  %1230 = vmatpush1.msra.mxu0 %v51
  %1231 = vmatprep.subr.mxu0 0.0
  %1232 = vmatpush1.msra.mxu0 0.0
  %1233 = vmatprep.subr.mxu0 0.0
  %1234 = vmatpush1.msra.mxu0 0.0
  %1235 = vmatprep.subr.mxu0 0.0
  %1236 = vmatpush1.msra.mxu0 0.0
  %1237 = vmatprep.subr.mxu0 0.0
  %1238 = vmatpush1.msra.mxu0 0.0
  %1239 = vmatprep.subr.mxu0 0.0
  %1240 = vmatpush1.msra.mxu0 0.0
  %1241 = vmatprep.subr.mxu0 0.0
  %1242 = vmatpush1.msra.mxu0 0.0
  %1243 = vmatprep.subr.mxu0 0.0
  %1244 = vmatpush1.msra.mxu0 0.0
  %1245 = vmatprep.subr.mxu0 0.0
  %1246 = vmatpush1.msra.mxu0 0.0
  %1247 = vmatprep.subr.mxu0 0.0
  %1248 = vmatpush1.msra.mxu0 0.0
  %1249 = vmatprep.subr.mxu0 0.0
  %1250 = vmatpush1.msra.mxu0 0.0
  %1251 = vmatprep.subr.mxu0 0.0
  %1252 = vmatpush1.msra.mxu0 0.0
  %1253 = vmatprep.subr.mxu0 0.0
  %1254 = vmatpush1.msra.mxu0 0.0
  %1255 = vmatprep.subr.mxu0 0.0
  %1256 = vmatpush1.msra.mxu0 0.0
  %1257 = vmatprep.subr.mxu0 0.0
  %1258 = vmatpush1.msra.mxu0 0.0
  %1259 = vmatprep.subr.mxu0 0.0
  %1260 = vmatpush1.msra.mxu0 0.0
  %1261 = vmatprep.subr.mxu0 0.0
  %1262 = vmatpush1.msra.mxu0 0.0
  %1263 = vmatprep.mubr.f32.mxu0 0.0
  %1264 = vmatmul.mubr.f32.gmra.mrb[0].mxu0 %v1185
  %v1265 = vpop.f32.mrb[0].mxu0
  %v1266 = vadd.f32 0.0, %v1265
  %v1267 = vpop.f32.mrb[0].mxu0
  %1268 = vdwg.mxu0
  %v1269 = vmul.f32 %v1266, %v525
  %1270 = vmatprep.subr.mxu0 0.0
  %1271 = vmatpush1.msra.mxu0 %v36
  %1272 = vmatprep.subr.mxu0 0.0
  %1273 = vmatpush1.msra.mxu0 %v37
  %1274 = vmatprep.subr.mxu0 0.0
  %1275 = vmatpush1.msra.mxu0 %v38
  %1276 = vmatprep.subr.mxu0 0.0
  %1277 = vmatpush1.msra.mxu0 %v39
  %1278 = vmatprep.subr.mxu0 0.0
  %1279 = vmatpush1.msra.mxu0 %v40
  %1280 = vmatprep.subr.mxu0 0.0
  %1281 = vmatpush1.msra.mxu0 %v41
  %1282 = vmatprep.subr.mxu0 0.0
  %1283 = vmatpush1.msra.mxu0 %v42
  %1284 = vmatprep.subr.mxu0 0.0
  %1285 = vmatpush1.msra.mxu0 %v43
  %1286 = vmatprep.subr.mxu0 0.0
  %1287 = vmatpush1.msra.mxu0 %v44
  %1288 = vmatprep.subr.mxu0 0.0
  %1289 = vmatpush1.msra.mxu0 %v45
  %1290 = vmatprep.subr.mxu0 0.0
  %1291 = vmatpush1.msra.mxu0 %v46
  %1292 = vmatprep.subr.mxu0 0.0
  %1293 = vmatpush1.msra.mxu0 %v47
  %1294 = vmatprep.subr.mxu0 0.0
  %1295 = vmatpush1.msra.mxu0 %v48
  %1296 = vmatprep.subr.mxu0 0.0
  %1297 = vmatpush1.msra.mxu0 %v49
  %1298 = vmatprep.subr.mxu0 0.0
  %1299 = vmatpush1.msra.mxu0 %v50
  %1300 = vmatprep.subr.mxu0 0.0
  %1301 = vmatpush1.msra.mxu0 %v51
  %1302 = vmatprep.subr.mxu0 0.0
  %1303 = vmatpush1.msra.mxu0 0.0
  %1304 = vmatprep.subr.mxu0 0.0
  %1305 = vmatpush1.msra.mxu0 0.0
  %1306 = vmatprep.subr.mxu0 0.0
  %1307 = vmatpush1.msra.mxu0 0.0
  %1308 = vmatprep.subr.mxu0 0.0
  %1309 = vmatpush1.msra.mxu0 0.0
  %1310 = vmatprep.subr.mxu0 0.0
  %1311 = vmatpush1.msra.mxu0 0.0
  %1312 = vmatprep.subr.mxu0 0.0
  %1313 = vmatpush1.msra.mxu0 0.0
  %1314 = vmatprep.subr.mxu0 0.0
  %1315 = vmatpush1.msra.mxu0 0.0
  %1316 = vmatprep.subr.mxu0 0.0
  %1317 = vmatpush1.msra.mxu0 0.0
  %1318 = vmatprep.subr.mxu0 0.0
  %1319 = vmatpush1.msra.mxu0 0.0
  %1320 = vmatprep.subr.mxu0 0.0
  %1321 = vmatpush1.msra.mxu0 0.0
  %1322 = vmatprep.subr.mxu0 0.0
  %1323 = vmatpush1.msra.mxu0 0.0
  %1324 = vmatprep.subr.mxu0 0.0
  %1325 = vmatpush1.msra.mxu0 0.0
  %1326 = vmatprep.subr.mxu0 0.0
  %1327 = vmatpush1.msra.mxu0 0.0
  %1328 = vmatprep.subr.mxu0 0.0
  %1329 = vmatpush1.msra.mxu0 0.0
  %1330 = vmatprep.subr.mxu0 0.0
  %1331 = vmatpush1.msra.mxu0 0.0
  %1332 = vmatprep.subr.mxu0 0.0
  %1333 = vmatpush1.msra.mxu0 0.0
  %1334 = vmatprep.mubr.f32.mxu0 0.0
  %1335 = vmatmul.mubr.f32.gmra.mrb[0].mxu0 %v1198
  %v1336 = vpop.f32.mrb[0].mxu0
  %v1337 = vadd.f32 0.0, %v1336
  %v1338 = vpop.f32.mrb[0].mxu0
  %1339 = vdwg.mxu0
  %v1340 = vmul.f32 %v1337, %v525
  %v1341 = vmul.f32 %v1269, %v1269
  %v1342 = vsub.f32 %v1340, %v1341
  %v1343 = vmax.f32 %v1342, 0.0
  %v1344 = vadd.f32 %v1343, 1e-05
  %v1345 = vrsqrt.pop %v1344
  %v1346 = vld [vmem:[%s7] sm:$0x1]
  %v1347 = vmul.f32 %v1346, %v1345
  %v1348 = vld [vmem:[%s8] sm:$0x1]
  %v1349 = vmul.f32 %v1269, %v1347
  %v1350 = vsub.f32 %v1348, %v1349
  %v1352 = vlaneseq
  %v1353 = vshrl.u32 %v1352, 7
  %v1354 = vsub.s32 0, %v1353
  %v1355 = vrot.slane %v1347, %v1354
  %v1357 = vmul.f32 %v1173, %v1355
  %v1358 = vmul.f32 %v1174, %v1355
  %v1359 = vmul.f32 %v1175, %v1355
  %v1360 = vmul.f32 %v1176, %v1355
  %v1362 = vlaneseq
  %v1363 = vshrl.u32 %v1362, 7
  %v1364 = vsub.s32 0, %v1363
  %v1365 = vrot.slane %v1350, %v1364
  %v1367 = vadd.f32 %v1357, %v1365
  %v1368 = vadd.f32 %v1358, %v1365
  %v1369 = vadd.f32 %v1359, %v1365
  %v1370 = vadd.f32 %v1360, %v1365
  %v1371 = vld [vmem:[%s0] sm:$0xf]
  %v1372 = vld [vmem:[%s0 + $0x4] sm:$0xf]
  %v1373 = vld [vmem:[%s0 + $0x8] sm:$0x1]
  %v1374 = vld [vmem:[%s0 + $0xc] sm:$0xf]
  %v1375 = vld [vmem:[%s0 + $0x10] sm:$0xf]
  %v1376 = vld [vmem:[%s0 + $0x14] sm:$0x1]
  %v1378 = vshrl.u32 %v1371, 16
  %v1380 = vrot.slane %v1378, 4
  %v1381 = vshll.u32 %v1371, 16
  %v1383 = vrot.slane %v1381, 5
  %v1384 = vor.u32 %v1380, %v1383
  %v1385 = vrot.slane %v1384, 4
  %v1387 = vshll.u32 %v1372, 16
  %v1389 = vrot.slane %v1387, 5
  %v1390 = vsel %vm68, %v1385, %v1389
  %v1391 = vshrl.u32 %v1372, 16
  %v1393 = vrot.slane %v1391, 4
  %v1394 = vor.u32 %v1393, %v1389
  %v1395 = vrot.slane %v1394, 4
  %v1397 = vshll.u32 %v1373, 16
  %v1399 = vrot.slane %v1397, 5
  %v1400 = vsel %vm68, %v1395, %v1399
  %v1402 = vshrl.u32 %v1374, 16
  %v1404 = vrot.slane %v1402, 4
  %v1405 = vshll.u32 %v1374, 16
  %v1407 = vrot.slane %v1405, 5
  %v1408 = vor.u32 %v1404, %v1407
  %v1409 = vrot.slane %v1408, 4
  %v1411 = vshll.u32 %v1375, 16
  %v1413 = vrot.slane %v1411, 5
  %v1414 = vsel %vm68, %v1409, %v1413
  %v1415 = vshrl.u32 %v1375, 16
  %v1417 = vrot.slane %v1415, 4
  %v1418 = vor.u32 %v1417, %v1413
  %v1419 = vrot.slane %v1418, 4
  %v1421 = vshll.u32 %v1376, 16
  %v1423 = vrot.slane %v1421, 5
  %v1424 = vsel %vm68, %v1419, %v1423
  %v1425 = vld [vmem:[%s3] sm:$0xf]
  %v1426 = vld [vmem:[%s3 + $0x4] sm:$0xf]
  %v1427 = vld [vmem:[%s3 + $0x8] sm:$0xf]
  %v1428 = vld [vmem:[%s3 + $0xc] sm:$0xf]
  %v1429 = vld [vmem:[%s3 + $0x10] sm:$0xf]
  %v1430 = vld [vmem:[%s3 + $0x14] sm:$0xf]
  %v1431 = vld [vmem:[%s3 + $0x18] sm:$0xf]
  %v1432 = vld [vmem:[%s3 + $0x1c] sm:$0xf]
  %v1433 = vld [vmem:[%s6] sm:$0x1]
  %v1435 = vlaneseq
  %v1436 = vshrl.u32 %v1435, 7
  %v1437 = vsub.s32 0, %v1436
  %v1438 = vrot.slane %v1433, %v1437
  %v1440 = vunpack.c.l.b16 %v1390
  %v1441 = vunpack.c.l.b16 %v1400
  %v1442 = vunpack.c.l.b16 %v1414
  %v1443 = vunpack.c.l.b16 %v1424
  %v1444 = vpack.c.b16 %v1441, %v1440
  %v1445 = vpack.c.b16 %v1443, %v1442
  %v1454 = vunpack.c.l.b16 %v1425
  %v1455 = vunpack.c.l.b16 %v1426
  %v1456 = vunpack.c.l.b16 %v1427
  %v1457 = vunpack.c.l.b16 %v1428
  %v1458 = vunpack.c.l.b16 %v1429
  %v1459 = vunpack.c.l.b16 %v1430
  %v1460 = vunpack.c.l.b16 %v1431
  %v1461 = vunpack.c.l.b16 %v1432
  %v1462 = vpack.c.b16 %v1455, %v1454
  %v1463 = vpack.c.b16 %v1457, %v1456
  %v1464 = vpack.c.b16 %v1459, %v1458
  %v1465 = vpack.c.b16 %v1461, %v1460
  %v1471 = vsel %vm156, %v1444, 0
  %v1474 = vsel %vm156, %v1445, 0
  %1476 = vmatprep.subr.bf16.mxu0 0
  %1477 = vmatpush1.bf16.msra.mxu0 %v1462
  %1478 = vmatprep.subr.bf16.mxu0 0
  %1479 = vmatpush1.bf16.msra.mxu0 %v1463
  %1480 = vmatprep.subr.bf16.mxu0 0
  %1481 = vmatpush1.bf16.msra.mxu0 %v1464
  %1482 = vmatprep.subr.bf16.mxu0 0
  %1483 = vmatpush1.bf16.msra.mxu0 %v1465
  %1484 = vmatprep.subr.bf16.mxu0 0
  %1485 = vmatpush1.bf16.msra.mxu0 0
  %1486 = vmatprep.subr.bf16.mxu0 0
  %1487 = vmatpush1.bf16.msra.mxu0 0
  %1488 = vmatprep.subr.bf16.mxu0 0
  %1489 = vmatpush1.bf16.msra.mxu0 0
  %1490 = vmatprep.subr.bf16.mxu0 0
  %1491 = vmatpush1.bf16.msra.mxu0 0
  %1492 = vmatprep.subr.bf16.mxu0 0
  %1493 = vmatpush1.bf16.msra.mxu0 0
  %1494 = vmatprep.subr.bf16.mxu0 0
  %1495 = vmatpush1.bf16.msra.mxu0 0
  %1496 = vmatprep.subr.bf16.mxu0 0
  %1497 = vmatpush1.bf16.msra.mxu0 0
  %1498 = vmatprep.subr.bf16.mxu0 0
  %1499 = vmatpush1.bf16.msra.mxu0 0
  %1500 = vmatprep.subr.bf16.mxu0 0
  %1501 = vmatpush1.bf16.msra.mxu0 0
  %1502 = vmatprep.subr.bf16.mxu0 0
  %1503 = vmatpush1.bf16.msra.mxu0 0
  %1504 = vmatprep.subr.bf16.mxu0 0
  %1505 = vmatpush1.bf16.msra.mxu0 0
  %1506 = vmatprep.subr.bf16.mxu0 0
  %1507 = vmatpush1.bf16.msra.mxu0 0
  %1508 = vmatprep.mubr.bf16.mxu0 0
  %1509 = vmatmul.mubr.bf16.gmra.mrb[0].mxu0 %v1471
  %v1510 = vpop.f32.mrb[0].mxu0
  %v1511 = vadd.f32 %v1438, %v1510
  %v1512 = vpop.f32.mrb[0].mxu0
  %v1513 = vpop.f32.mrb[0].mxu0
  %v1514 = vadd.f32 %v1438, %v1513
  %v1515 = vpop.f32.mrb[0].mxu0
  %1516 = vmatprep.mubr.bf16.mxu0 0
  %1517 = vmatmul.mubr.bf16.gmra.mrb[0].mxu0 %v1474
  %v1518 = vpop.f32.mrb[0].mxu0
  %v1519 = vadd.f32 %v1438, %v1518
  %v1520 = vpop.f32.mrb[0].mxu0
  %v1521 = vpop.f32.mrb[0].mxu0
  %v1522 = vadd.f32 %v1438, %v1521
  %v1523 = vpop.f32.mrb[0].mxu0
  %1524 = vdwg.mxu0
  %v1525 = vadd.f32 %v1367, %v1511
  %v1526 = vadd.f32 %v1368, %v1514
  %v1527 = vadd.f32 %v1369, %v1519
  %v1528 = vadd.f32 %v1370, %v1522
  %v1529 = vmax.f32 %v1525, 0.0
  %v1530 = vmax.f32 %v1526, 0.0
  %v1531 = vmax.f32 %v1527, 0.0
  %v1532 = vmax.f32 %v1528, 0.0
  %1533 = vst [vmem:[%s10] sm:$0xff] %v1529
  %1534 = vst [vmem:[%s10 + $0x8] sm:$0xff] %v1530
  %1535 = vst [vmem:[%s10 + $0x10] sm:$0xff] %v1531
  %1536 = vst [vmem:[%s10 + $0x18] sm:$0xff] %v1532
  // Predicated region
  $region42: #{resblock_forward.1} parent=0 // pred_check
    _
  $region43: #{resblock_forward.1} parent=0 // pred_check_branch
    %1538 = sbr.rel (0) target = $region45
  $region44: #{resblock_forward.1} parent=0 // pred_region
    _
  $region45: #{resblock_forward.1} parent=0 // pred_fallthru
    _
  // Predicated region
  $region46: #{resblock_forward.1} parent=0 // pred_check
    _
  $region47: #{resblock_forward.1} parent=0 // pred_check_branch
    %1540 = sbr.rel (0) target = $region49
  $region48: #{resblock_forward.1} parent=0 // pred_region
    _
  $region49: #{resblock_forward.1} parent=0 // pred_fallthru
    _

</llo_original>
